<compile_context>
chip_gen: v7x
topology: tpu7x:2x2x1
jax: 0.10.0
libtpu: 0.0.40
codegen_flags: <defaults>
</compile_context>

<pallas_src>
import math

import jax
import jax.numpy as jnp
from jax.experimental import pallas as pl
from jax.experimental.pallas import tpu as pltpu


# --------------------------------------------------------------------------
# VMEM-aware tile selection helpers
# --------------------------------------------------------------------------
def _vmem_budget_bytes():
    cap = 64 << 20  # v7x-safe fallback (64 MiB per TensorCore)
    try:
        info = pltpu.get_tpu_info()
        cap = int(getattr(info, "vmem_capacity_bytes", cap))
    except Exception:
        pass
    return cap


def _vmem_limit_bytes(est_bytes):
    budget = _vmem_budget_bytes()
    return int(min(max(32 << 20, 2 * est_bytes), (budget * 3) // 4))


def _choose_row_tile(H, W, c0, c_out, budget):
    """Largest divisor of H whose per-step footprint fits the VMEM budget."""
    best = 1
    for tih in range(1, H + 1):
        if H % tih:
            continue
        rows = tih * W
        foot = (2 * (tih + 2) * (W + 2) * c0 * 2      # double-buffered input block (bf16)
                + 2 * 9 * c0 * 2 * c_out * 2          # double-buffered folded weight (bf16)
                + 2 * tih * 2 * W * c_out * 4         # double-buffered output block (f32)
                + rows * 2 * c_out * 4                # f32 accumulator value
                + rows * 9 * c0 * 2)                  # staged tap slices (bf16)
        if foot <= (budget * 3) // 5 and rows <= 8192:
            best = tih
    return best


def _choose_m_tile(M, K, N, budget):
    """Row tile for the 1x1-conv matmul: big, lane/sublane dense, >=2 grid steps."""
    for tm in (1024, 512, 256, 128, 64, 32, 16, 8):
        foot = 2 * tm * K * 2 + 2 * K * N * 2 + 2 * tm * N * 4 + tm * N * 4
        if foot <= (budget * 3) // 5 and M >= 2 * tm:
            return tm
    return 8


# --------------------------------------------------------------------------
# ConvTranspose2d(4,2,1) tap folding: (Cin, Cout, 4, 4) -> (9*Cin, 4*Cout)
# rows ordered (r, s, cin), columns ordered (dy, dx, cout)
# --------------------------------------------------------------------------
def _conv_transpose_as_matmul_weight(w_t):
    c_in, c_out = w_t.shape[0], w_t.shape[1]
    blocks = []
    for r in range(3):
        for s in range(3):
            cols = []
            for dy in range(2):
                for dx in range(2):
                    a, b = r - dy, s - dx
                    if a in (0, 1) and b in (0, 1):
                        cols.append(w_t[:, :, 3 - dy - 2 * a, 3 - dx - 2 * b])
                    else:
                        cols.append(jnp.zeros((c_in, c_out), w_t.dtype))
            blocks.append(jnp.concatenate(cols, axis=1))      # (Cin, 4*Cout)
    return jnp.concatenate(blocks, axis=0)                    # (9*Cin, 4*Cout)


# --------------------------------------------------------------------------
# path1 kernel: one (row-block, dy) step of ConvTranspose2d(4,2,1)+BN+ReLU
# --------------------------------------------------------------------------
def _deconv_bn_relu_kernel(x_ref, w_ref, scale_ref, shift_ref, o_ref):
    # x_ref:     (tih+2, W+2, c0)   bf16   zero-padded input rows (with halo)
    # w_ref:     (9*c0, 2*c_out)    bf16   folded taps for this row parity dy
    # scale_ref: (1, 2*c_out)       f32    per-(dx, channel) BN scale
    # shift_ref: (1, 2*c_out)       f32    per-(dx, channel) BN shift (+conv bias)
    # o_ref:     (tih, 2*W, c_out)  f32    NHWC output rows y = 2*(i0+i) + dy
    tih, w2, c_out = o_ref.shape
    w_img = w2 // 2
    c0 = x_ref.shape[-1]

    acc = None
    for r in range(3):                       # 3x3 padded-window taps, gathered in VMEM
        for s in range(3):
            t = r * 3 + s
            lhs = x_ref[r:r + tih, s:s + w_img, :].reshape(tih * w_img, c0)
            part = jnp.dot(lhs, w_ref[t * c0:(t + 1) * c0, :],
                           preferred_element_type=jnp.float32)
            acc = part if acc is None else acc + part

    y = jnp.maximum(acc * scale_ref[...] + shift_ref[...], 0.0)
    # (tih*W, 2*c_out) -> (tih*W, 2, c_out) -> (tih, 2W, c_out): memory-order
    # preserving; lane split is at a 128-aligned boundary when c_out % 128 == 0.
    y = y.reshape(tih * w_img, 2, c_out).reshape(tih, w2, c_out)
    o_ref[...] = y.astype(o_ref.dtype)


def conv_transpose_bn_relu(x0_nchw, wt, bt, gamma, beta, mean, var, eps=1e-5):
    """path1: ConvTranspose2d(4,2,1)+BN(inference)+ReLU -> NHWC (B, 2H, 2W, c_out)."""
    B, c0, H, W = x0_nchw.shape
    c_out = wt.shape[1]

    # Fold BN (inference) + conv bias into per-channel scale/shift, tiled over dx.
    scale = gamma / jnp.sqrt(var + eps)
    shift = beta + scale * (bt - mean)
    scale2 = jnp.tile(scale, 2).reshape(1, 2 * c_out).astype(jnp.float32)
    shift2 = jnp.tile(shift, 2).reshape(1, 2 * c_out).astype(jnp.float32)

    # Folded taps, split by output row parity dy: (2, 9*c0, 2*c_out), cols (dx, c).
    w_big = _conv_transpose_as_matmul_weight(wt)                       # (9*c0, 4*c_out)
    w_dy = jnp.transpose(w_big.reshape(9 * c0, 2, 2, c_out), (1, 0, 2, 3))
    w_dy = w_dy.reshape(2, 9 * c0, 2 * c_out).astype(jnp.bfloat16)

    # Once zero-padded NHWC input in bf16; row-blocks carry a 2-row halo only.
    x = jnp.transpose(x0_nchw, (0, 2, 3, 1)).astype(jnp.bfloat16)
    xp = jnp.pad(x, ((0, 0), (1, 1), (1, 1), (0, 0)))                  # (B, H+2, W+2, c0)

    budget = _vmem_budget_bytes()
    tih = _choose_row_tile(H, W, c0, c_out, budget)
    nrb = H // tih
    xb = jnp.stack([xp[:, i * tih:i * tih + tih + 2] for i in range(nrb)],
                   axis=1)                                             # (B, nrb, tih+2, W+2, c0)

    est = (2 * (tih + 2) * (W + 2) * c0 * 2 + 2 * 9 * c0 * 2 * c_out * 2
           + 2 * tih * 2 * W * c_out * 4 + tih * W * 2 * c_out * 4
           + tih * W * 9 * c0 * 2)

    out = pl.pallas_call(
        _deconv_bn_relu_kernel,
        out_shape=jax.ShapeDtypeStruct((B * H, 2, 2 * W, c_out), jnp.float32),
        grid=(B, nrb, 2),
        in_specs=[
            pl.BlockSpec((None, None, tih + 2, W + 2, c0),
                         lambda b, ib, dy: (b, ib, 0, 0, 0)),
            pl.BlockSpec((None, 9 * c0, 2 * c_out),
                         lambda b, ib, dy: (dy, 0, 0)),
            pl.BlockSpec((1, 2 * c_out), lambda b, ib, dy: (0, 0)),
            pl.BlockSpec((1, 2 * c_out), lambda b, ib, dy: (0, 0)),
        ],
        out_specs=pl.BlockSpec((tih, None, 2 * W, c_out),
                               lambda b, ib, dy: (b * nrb + ib, dy, 0, 0)),
        compiler_params=pltpu.CompilerParams(
            dimension_semantics=("parallel", "parallel", "arbitrary"),
            vmem_limit_bytes=_vmem_limit_bytes(est)),
        cost_estimate=pl.CostEstimate(
            flops=2 * B * H * W * 9 * c0 * 4 * c_out,
            transcendentals=0,
            bytes_accessed=xb.size * 2 + w_dy.size * 2 + B * 4 * H * W * c_out * 4),
    )(xb, w_dy, scale2, shift2)

    return out.reshape(B, 2 * H, 2 * W, c_out)          # pure reshape (free)


# --------------------------------------------------------------------------
# path2 kernel: fused matmul (1x1 conv) + BN + ReLU, no K grid / no scratch
# --------------------------------------------------------------------------
def _matmul_bn_relu_kernel(x_ref, w_ref, scale_ref, shift_ref, o_ref):
    y = jnp.dot(x_ref[...], w_ref[...], preferred_element_type=jnp.float32)
    y = jnp.maximum(y * scale_ref[...] + shift_ref[...], 0.0)
    o_ref[...] = y.astype(o_ref.dtype)


def conv1x1_bn_relu(x_nchw, w2, gamma, beta, mean, var, eps=1e-5):
    """path2: 1x1 Conv (no bias)+BN(inference)+ReLU -> NHWC (B, H, W, c_out)."""
    B, c1, H, W = x_nchw.shape
    c_out = w2.shape[0]

    scale_v = gamma / jnp.sqrt(var + eps)
    shift_v = beta - scale_v * mean
    scale = scale_v.reshape(1, c_out).astype(jnp.float32)
    shift = shift_v.reshape(1, c_out).astype(jnp.float32)

    wm = w2[:, :, 0, 0].T.astype(jnp.bfloat16)                        # (c1, c_out)
    lhs = jnp.transpose(x_nchw, (0, 2, 3, 1)).reshape(B * H * W, c1)
    lhs = lhs.astype(jnp.bfloat16)

    M = lhs.shape[0]
    budget = _vmem_budget_bytes()
    tm = _choose_m_tile(M, c1, c_out, budget)
    Mp = ((M + tm - 1) // tm) * tm
    if Mp != M:
        lhs = jnp.pad(lhs, ((0, Mp - M), (0, 0)))

    est = 2 * tm * c1 * 2 + 2 * c1 * c_out * 2 + 2 * tm * c_out * 4

    out = pl.pallas_call(
        _matmul_bn_relu_kernel,
        out_shape=jax.ShapeDtypeStruct((Mp, c_out), jnp.float32),
        grid=(Mp // tm,),
        in_specs=[
            pl.BlockSpec((tm, c1), lambda i: (i, 0)),
            pl.BlockSpec((c1, c_out), lambda i: (0, 0)),
            pl.BlockSpec((1, c_out), lambda i: (0, 0)),
            pl.BlockSpec((1, c_out), lambda i: (0, 0)),
        ],
        out_specs=pl.BlockSpec((tm, c_out), lambda i: (i, 0)),
        compiler_params=pltpu.CompilerParams(
            dimension_semantics=("parallel",),
            vmem_limit_bytes=_vmem_limit_bytes(est)),
        cost_estimate=pl.CostEstimate(
            flops=2 * Mp * c1 * c_out, transcendentals=0,
            bytes_accessed=Mp * c1 * 2 + c1 * c_out * 2 + Mp * c_out * 4),
    )(lhs, wm, scale, shift)

    return out[:M].reshape(B, H, W, c_out)


# --------------------------------------------------------------------------
# MRFBlock forward
# --------------------------------------------------------------------------
def mrf_block_forward(x0, x1, params, eps=1e-5):
    """Pallas forward of MRFBlock: cat(path1(x0), path2(x1), dim=1), NCHW in/out."""
    (wt, bt, g1, b1, m1, v1, w2, g2, b2, m2, v2) = params
    B, c0, H, W = x0.shape
    _, c1, H2, W2 = x1.shape
    assert (H2, W2) == (2 * H, 2 * W)

    y1 = conv_transpose_bn_relu(x0, wt, bt, g1, b1, m1, v1, eps)   # (B, 2H, 2W, c_out)
    y2 = conv1x1_bn_relu(x1, w2, g2, b2, m2, v2, eps)              # (B, 2H, 2W, c_out)

    # The concat fuses into the single (unavoidable for NCHW) relayout pass below.
    out = jnp.concatenate([y1, y2], axis=-1)                       # (B, 2H, 2W, 2*c_out)
    return jnp.transpose(out, (0, 3, 1, 2))                        # NCHW


# --------------------------------------------------------------------------
# Pure-JAX reference (matches PyTorch MRFBlock forward in eval mode)
# --------------------------------------------------------------------------
def mrf_block_reference(x0, x1, params, eps=1e-5):
    (wt, bt, g1, b1, m1, v1, w2, g2, b2, m2, v2) = params
    hi = jax.lax.Precision.HIGHEST
    w_conv = jnp.transpose(jnp.flip(wt, (2, 3)), (1, 0, 2, 3))     # (Cout, Cin, 4, 4)
    y = jax.lax.conv_general_dilated(
        x0, w_conv, window_strides=(1, 1), padding=((2, 2), (2, 2)),
        lhs_dilation=(2, 2),
        dimension_numbers=("NCHW", "OIHW", "NCHW"), precision=hi)
    y = y + bt[None, :, None, None]
    y = (y - m1[None, :, None, None]) / jnp.sqrt(v1[None, :, None, None] + eps) \
        * g1[None, :, None, None] + b1[None, :, None, None]
    y = jnp.maximum(y, 0.0)

    z = jnp.einsum("bchw,oc->bohw", x1, w2[:, :, 0, 0], precision=hi)
    z = (z - m2[None, :, None, None]) / jnp.sqrt(v2[None, :, None, None] + eps) \
        * g2[None, :, None, None] + b2[None, :, None, None]
    z = jnp.maximum(z, 0.0)
    return jnp.concatenate([y, z], axis=1)


if __name__ == "__main__":
    key = jax.random.PRNGKey(0)
    # Small demo shapes; channel counts keep the matmul N a multiple of 128 lanes.
    B, H, W = 2, 8, 8
    c0, c1, c_out = 32, 16, 128          # in_planes=[32, 16], channels=128
    ks = jax.random.split(key, 13)

    x0 = jax.random.normal(ks[0], (B, c0, H, W), jnp.float32)
    x1 = jax.random.normal(ks[1], (B, c1, 2 * H, 2 * W), jnp.float32)

    wt = jax.random.normal(ks[2], (c0, c_out, 4, 4), jnp.float32) * math.sqrt(2.0 / (4 * 4 * c_out))
    bt = 0.1 * jax.random.normal(ks[3], (c_out,), jnp.float32)
    g1 = 1.0 + 0.1 * jax.random.normal(ks[4], (c_out,), jnp.float32)
    b1 = 0.1 * jax.random.normal(ks[5], (c_out,), jnp.float32)
    m1 = 0.1 * jax.random.normal(ks[6], (c_out,), jnp.float32)
    v1 = jax.random.uniform(ks[7], (c_out,), jnp.float32, 0.5, 1.5)

    w2 = jax.random.normal(ks[8], (c_out, c1, 1, 1), jnp.float32) * math.sqrt(2.0 / c_out)
    g2 = 1.0 + 0.1 * jax.random.normal(ks[9], (c_out,), jnp.float32)
    b2 = 0.1 * jax.random.normal(ks[10], (c_out,), jnp.float32)
    m2 = 0.1 * jax.random.normal(ks[11], (c_out,), jnp.float32)
    v2 = jax.random.uniform(ks[12], (c_out,), jnp.float32, 0.5, 1.5)

    params = (wt, bt, g1, b1, m1, v1, w2, g2, b2, m2, v2)

    out = mrf_block_forward(x0, x1, params)
    out = jax.block_until_ready(out)

    ref = mrf_block_reference(x0, x1, params)
    assert out.shape == (B, 2 * c_out, 2 * H, 2 * W), out.shape
    assert out.dtype == x0.dtype
    # bf16 inputs/weights with f32 accumulation: tolerance covers the cast error.
    max_err = float(jnp.max(jnp.abs(out - ref)))
    assert jnp.allclose(out, ref, atol=5e-2, rtol=5e-2), max_err

    print("KERNEL_OK")
</pallas_src>

<mosaic_0001>
module attributes {stable_mosaic.version = 11 : i64} {
  func.func @_deconv_bn_relu_kernel(%arg0: i32, %arg1: i32, %arg2: i32, %arg3: memref<1x1x10x10x32xbf16, #tpu.memory_space<vmem>>, %arg4: memref<1x288x256xbf16, #tpu.memory_space<vmem>>, %arg5: memref<1x256xf32, #tpu.memory_space<vmem>>, %arg6: memref<1x256xf32, #tpu.memory_space<vmem>>, %arg7: memref<8x1x16x128xf32, #tpu.memory_space<vmem>>) attributes {dimension_semantics = [#tpu.dimension_semantics<parallel>, #tpu.dimension_semantics<parallel>, #tpu.dimension_semantics<arbitrary>], iteration_bounds = array<i64: 2, 1, 2>, scalar_prefetch = 0 : i64, scratch_operands = 0 : i64, tpu.core_type = #tpu.core_type<tc>, window_params = [{transform_indices = @transform_0, window_bounds = array<i64: 1, 1, 10, 10, 32>}, {transform_indices = @transform_1, window_bounds = array<i64: 1, 288, 256>}, {pipeline_mode = #tpu.pipeline_mode<synchronous>, transform_indices = @transform_2, window_bounds = array<i64: 1, 256>}, {pipeline_mode = #tpu.pipeline_mode<synchronous>, transform_indices = @transform_3, window_bounds = array<i64: 1, 256>}, {transform_indices = @transform_4, window_bounds = array<i64: 8, 1, 16, 128>}]} {
    %c0 = arith.constant 0 : index
    %c0_0 = arith.constant 0 : index
    %c0_1 = arith.constant 0 : index
    %c0_2 = arith.constant 0 : index
    %c0_3 = arith.constant 0 : index
    %0 = vector.load %arg3[%c0, %c0_0, %c0_1, %c0_2, %c0_3] : memref<1x1x10x10x32xbf16, #tpu.memory_space<vmem>>, vector<1x1x8x8x32xbf16>
    %1 = vector.shape_cast %0 : vector<1x1x8x8x32xbf16> to vector<8x8x32xbf16>
    %2 = vector.shape_cast %1 : vector<8x8x32xbf16> to vector<64x32xbf16>
    %c0_4 = arith.constant 0 : index
    %c0_5 = arith.constant 0 : index
    %c0_6 = arith.constant 0 : index
    %3 = vector.load %arg4[%c0_4, %c0_5, %c0_6] : memref<1x288x256xbf16, #tpu.memory_space<vmem>>, vector<1x32x256xbf16>
    %4 = vector.shape_cast %3 : vector<1x32x256xbf16> to vector<32x256xbf16>
    %cst = arith.constant dense<0.000000e+00> : vector<64x256xf32>
    %5 = tpu.matmul %2, %4, %cst {dimension_numbers = #tpu.dot_dimension_numbers<[1], [0], [0], [1], [0, 0, 1, 1], [], []>} : vector<64x32xbf16>, vector<32x256xbf16>, vector<64x256xf32> -> vector<64x256xf32>
    %c0_7 = arith.constant 0 : index
    %c0_8 = arith.constant 0 : index
    %c0_9 = arith.constant 0 : index
    %c1 = arith.constant 1 : index
    %c0_10 = arith.constant 0 : index
    %6 = vector.load %arg3[%c0_7, %c0_8, %c0_9, %c1, %c0_10] : memref<1x1x10x10x32xbf16, #tpu.memory_space<vmem>>, vector<1x1x8x8x32xbf16>
    %7 = vector.shape_cast %6 : vector<1x1x8x8x32xbf16> to vector<8x8x32xbf16>
    %8 = vector.shape_cast %7 : vector<8x8x32xbf16> to vector<64x32xbf16>
    %c0_11 = arith.constant 0 : index
    %c32 = arith.constant 32 : index
    %c0_12 = arith.constant 0 : index
    %9 = vector.load %arg4[%c0_11, %c32, %c0_12] : memref<1x288x256xbf16, #tpu.memory_space<vmem>>, vector<1x32x256xbf16>
    %10 = vector.shape_cast %9 : vector<1x32x256xbf16> to vector<32x256xbf16>
    %cst_13 = arith.constant dense<0.000000e+00> : vector<64x256xf32>
    %11 = tpu.matmul %8, %10, %cst_13 {dimension_numbers = #tpu.dot_dimension_numbers<[1], [0], [0], [1], [0, 0, 1, 1], [], []>} : vector<64x32xbf16>, vector<32x256xbf16>, vector<64x256xf32> -> vector<64x256xf32>
    %12 = arith.addf %5, %11 : vector<64x256xf32>
    %c0_14 = arith.constant 0 : index
    %c0_15 = arith.constant 0 : index
    %c0_16 = arith.constant 0 : index
    %c2 = arith.constant 2 : index
    %c0_17 = arith.constant 0 : index
    %13 = vector.load %arg3[%c0_14, %c0_15, %c0_16, %c2, %c0_17] : memref<1x1x10x10x32xbf16, #tpu.memory_space<vmem>>, vector<1x1x8x8x32xbf16>
    %14 = vector.shape_cast %13 : vector<1x1x8x8x32xbf16> to vector<8x8x32xbf16>
    %15 = vector.shape_cast %14 : vector<8x8x32xbf16> to vector<64x32xbf16>
    %c0_18 = arith.constant 0 : index
    %c64 = arith.constant 64 : index
    %c0_19 = arith.constant 0 : index
    %16 = vector.load %arg4[%c0_18, %c64, %c0_19] : memref<1x288x256xbf16, #tpu.memory_space<vmem>>, vector<1x32x256xbf16>
    %17 = vector.shape_cast %16 : vector<1x32x256xbf16> to vector<32x256xbf16>
    %cst_20 = arith.constant dense<0.000000e+00> : vector<64x256xf32>
    %18 = tpu.matmul %15, %17, %cst_20 {dimension_numbers = #tpu.dot_dimension_numbers<[1], [0], [0], [1], [0, 0, 1, 1], [], []>} : vector<64x32xbf16>, vector<32x256xbf16>, vector<64x256xf32> -> vector<64x256xf32>
    %19 = arith.addf %12, %18 : vector<64x256xf32>
    %c0_21 = arith.constant 0 : index
    %c0_22 = arith.constant 0 : index
    %c1_23 = arith.constant 1 : index
    %c0_24 = arith.constant 0 : index
    %c0_25 = arith.constant 0 : index
    %20 = vector.load %arg3[%c0_21, %c0_22, %c1_23, %c0_24, %c0_25] : memref<1x1x10x10x32xbf16, #tpu.memory_space<vmem>>, vector<1x1x8x8x32xbf16>
    %21 = vector.shape_cast %20 : vector<1x1x8x8x32xbf16> to vector<8x8x32xbf16>
    %22 = vector.shape_cast %21 : vector<8x8x32xbf16> to vector<64x32xbf16>
    %c0_26 = arith.constant 0 : index
    %c96 = arith.constant 96 : index
    %c0_27 = arith.constant 0 : index
    %23 = vector.load %arg4[%c0_26, %c96, %c0_27] : memref<1x288x256xbf16, #tpu.memory_space<vmem>>, vector<1x32x256xbf16>
    %24 = vector.shape_cast %23 : vector<1x32x256xbf16> to vector<32x256xbf16>
    %cst_28 = arith.constant dense<0.000000e+00> : vector<64x256xf32>
    %25 = tpu.matmul %22, %24, %cst_28 {dimension_numbers = #tpu.dot_dimension_numbers<[1], [0], [0], [1], [0, 0, 1, 1], [], []>} : vector<64x32xbf16>, vector<32x256xbf16>, vector<64x256xf32> -> vector<64x256xf32>
    %26 = arith.addf %19, %25 : vector<64x256xf32>
    %c0_29 = arith.constant 0 : index
    %c0_30 = arith.constant 0 : index
    %c1_31 = arith.constant 1 : index
    %c1_32 = arith.constant 1 : index
    %c0_33 = arith.constant 0 : index
    %27 = vector.load %arg3[%c0_29, %c0_30, %c1_31, %c1_32, %c0_33] : memref<1x1x10x10x32xbf16, #tpu.memory_space<vmem>>, vector<1x1x8x8x32xbf16>
    %28 = vector.shape_cast %27 : vector<1x1x8x8x32xbf16> to vector<8x8x32xbf16>
    %29 = vector.shape_cast %28 : vector<8x8x32xbf16> to vector<64x32xbf16>
    %c0_34 = arith.constant 0 : index
    %c128 = arith.constant 128 : index
    %c0_35 = arith.constant 0 : index
    %30 = vector.load %arg4[%c0_34, %c128, %c0_35] : memref<1x288x256xbf16, #tpu.memory_space<vmem>>, vector<1x32x256xbf16>
    %31 = vector.shape_cast %30 : vector<1x32x256xbf16> to vector<32x256xbf16>
    %cst_36 = arith.constant dense<0.000000e+00> : vector<64x256xf32>
    %32 = tpu.matmul %29, %31, %cst_36 {dimension_numbers = #tpu.dot_dimension_numbers<[1], [0], [0], [1], [0, 0, 1, 1], [], []>} : vector<64x32xbf16>, vector<32x256xbf16>, vector<64x256xf32> -> vector<64x256xf32>
    %33 = arith.addf %26, %32 : vector<64x256xf32>
    %c0_37 = arith.constant 0 : index
    %c0_38 = arith.constant 0 : index
    %c1_39 = arith.constant 1 : index
    %c2_40 = arith.constant 2 : index
    %c0_41 = arith.constant 0 : index
    %34 = vector.load %arg3[%c0_37, %c0_38, %c1_39, %c2_40, %c0_41] : memref<1x1x10x10x32xbf16, #tpu.memory_space<vmem>>, vector<1x1x8x8x32xbf16>
    %35 = vector.shape_cast %34 : vector<1x1x8x8x32xbf16> to vector<8x8x32xbf16>
    %36 = vector.shape_cast %35 : vector<8x8x32xbf16> to vector<64x32xbf16>
    %c0_42 = arith.constant 0 : index
    %c160 = arith.constant 160 : index
    %c0_43 = arith.constant 0 : index
    %37 = vector.load %arg4[%c0_42, %c160, %c0_43] : memref<1x288x256xbf16, #tpu.memory_space<vmem>>, vector<1x32x256xbf16>
    %38 = vector.shape_cast %37 : vector<1x32x256xbf16> to vector<32x256xbf16>
    %cst_44 = arith.constant dense<0.000000e+00> : vector<64x256xf32>
    %39 = tpu.matmul %36, %38, %cst_44 {dimension_numbers = #tpu.dot_dimension_numbers<[1], [0], [0], [1], [0, 0, 1, 1], [], []>} : vector<64x32xbf16>, vector<32x256xbf16>, vector<64x256xf32> -> vector<64x256xf32>
    %40 = arith.addf %33, %39 : vector<64x256xf32>
    %c0_45 = arith.constant 0 : index
    %c0_46 = arith.constant 0 : index
    %c2_47 = arith.constant 2 : index
    %c0_48 = arith.constant 0 : index
    %c0_49 = arith.constant 0 : index
    %41 = vector.load %arg3[%c0_45, %c0_46, %c2_47, %c0_48, %c0_49] : memref<1x1x10x10x32xbf16, #tpu.memory_space<vmem>>, vector<1x1x8x8x32xbf16>
    %42 = vector.shape_cast %41 : vector<1x1x8x8x32xbf16> to vector<8x8x32xbf16>
    %43 = vector.shape_cast %42 : vector<8x8x32xbf16> to vector<64x32xbf16>
    %c0_50 = arith.constant 0 : index
    %c192 = arith.constant 192 : index
    %c0_51 = arith.constant 0 : index
    %44 = vector.load %arg4[%c0_50, %c192, %c0_51] : memref<1x288x256xbf16, #tpu.memory_space<vmem>>, vector<1x32x256xbf16>
    %45 = vector.shape_cast %44 : vector<1x32x256xbf16> to vector<32x256xbf16>
    %cst_52 = arith.constant dense<0.000000e+00> : vector<64x256xf32>
    %46 = tpu.matmul %43, %45, %cst_52 {dimension_numbers = #tpu.dot_dimension_numbers<[1], [0], [0], [1], [0, 0, 1, 1], [], []>} : vector<64x32xbf16>, vector<32x256xbf16>, vector<64x256xf32> -> vector<64x256xf32>
    %47 = arith.addf %40, %46 : vector<64x256xf32>
    %c0_53 = arith.constant 0 : index
    %c0_54 = arith.constant 0 : index
    %c2_55 = arith.constant 2 : index
    %c1_56 = arith.constant 1 : index
    %c0_57 = arith.constant 0 : index
    %48 = vector.load %arg3[%c0_53, %c0_54, %c2_55, %c1_56, %c0_57] : memref<1x1x10x10x32xbf16, #tpu.memory_space<vmem>>, vector<1x1x8x8x32xbf16>
    %49 = vector.shape_cast %48 : vector<1x1x8x8x32xbf16> to vector<8x8x32xbf16>
    %50 = vector.shape_cast %49 : vector<8x8x32xbf16> to vector<64x32xbf16>
    %c0_58 = arith.constant 0 : index
    %c224 = arith.constant 224 : index
    %c0_59 = arith.constant 0 : index
    %51 = vector.load %arg4[%c0_58, %c224, %c0_59] : memref<1x288x256xbf16, #tpu.memory_space<vmem>>, vector<1x32x256xbf16>
    %52 = vector.shape_cast %51 : vector<1x32x256xbf16> to vector<32x256xbf16>
    %cst_60 = arith.constant dense<0.000000e+00> : vector<64x256xf32>
    %53 = tpu.matmul %50, %52, %cst_60 {dimension_numbers = #tpu.dot_dimension_numbers<[1], [0], [0], [1], [0, 0, 1, 1], [], []>} : vector<64x32xbf16>, vector<32x256xbf16>, vector<64x256xf32> -> vector<64x256xf32>
    %54 = arith.addf %47, %53 : vector<64x256xf32>
    %c0_61 = arith.constant 0 : index
    %c0_62 = arith.constant 0 : index
    %c2_63 = arith.constant 2 : index
    %c2_64 = arith.constant 2 : index
    %c0_65 = arith.constant 0 : index
    %55 = vector.load %arg3[%c0_61, %c0_62, %c2_63, %c2_64, %c0_65] : memref<1x1x10x10x32xbf16, #tpu.memory_space<vmem>>, vector<1x1x8x8x32xbf16>
    %56 = vector.shape_cast %55 : vector<1x1x8x8x32xbf16> to vector<8x8x32xbf16>
    %57 = vector.shape_cast %56 : vector<8x8x32xbf16> to vector<64x32xbf16>
    %c0_66 = arith.constant 0 : index
    %c256 = arith.constant 256 : index
    %c0_67 = arith.constant 0 : index
    %58 = vector.load %arg4[%c0_66, %c256, %c0_67] : memref<1x288x256xbf16, #tpu.memory_space<vmem>>, vector<1x32x256xbf16>
    %59 = vector.shape_cast %58 : vector<1x32x256xbf16> to vector<32x256xbf16>
    %cst_68 = arith.constant dense<0.000000e+00> : vector<64x256xf32>
    %60 = tpu.matmul %57, %59, %cst_68 {dimension_numbers = #tpu.dot_dimension_numbers<[1], [0], [0], [1], [0, 0, 1, 1], [], []>} : vector<64x32xbf16>, vector<32x256xbf16>, vector<64x256xf32> -> vector<64x256xf32>
    %61 = arith.addf %54, %60 : vector<64x256xf32>
    %c0_69 = arith.constant 0 : index
    %c0_70 = arith.constant 0 : index
    %62 = vector.load %arg5[%c0_69, %c0_70] : memref<1x256xf32, #tpu.memory_space<vmem>>, vector<1x256xf32>
    %63 = vector.broadcast %62 : vector<1x256xf32> to vector<64x256xf32>
    %64 = arith.mulf %61, %63 : vector<64x256xf32>
    %c0_71 = arith.constant 0 : index
    %c0_72 = arith.constant 0 : index
    %65 = vector.load %arg6[%c0_71, %c0_72] : memref<1x256xf32, #tpu.memory_space<vmem>>, vector<1x256xf32>
    %66 = vector.broadcast %65 : vector<1x256xf32> to vector<64x256xf32>
    %67 = arith.addf %64, %66 : vector<64x256xf32>
    %cst_73 = arith.constant 0.000000e+00 : f32
    %68 = vector.broadcast %cst_73 : f32 to vector<64x256xf32>
    %69 = arith.maximumf %67, %68 : vector<64x256xf32>
    %70 = vector.shape_cast %69 : vector<64x256xf32> to vector<64x2x128xf32>
    %71 = vector.shape_cast %70 : vector<64x2x128xf32> to vector<8x16x128xf32>
    %c0_74 = arith.constant 0 : index
    %c0_75 = arith.constant 0 : index
    %c0_76 = arith.constant 0 : index
    %c0_77 = arith.constant 0 : index
    %72 = vector.load %arg7[%c0_74, %c0_75, %c0_76, %c0_77] : memref<8x1x16x128xf32, #tpu.memory_space<vmem>>, vector<8x1x16x128xf32>
    %73 = vector.shape_cast %72 : vector<8x1x16x128xf32> to vector<8x16x128xf32>
    %74 = vector.shape_cast %71 : vector<8x16x128xf32> to vector<8x1x16x128xf32>
    tpu.vector_store %arg7[%c0_74, %c0_75, %c0_76, %c0_77], %74 {strides = array<i32>} : memref<8x1x16x128xf32, #tpu.memory_space<vmem>>, vector<8x1x16x128xf32>,
    return
  }
  func.func @transform_0(%arg0: i32, %arg1: i32, %arg2: i32) -> (i32, i32, i32, i32, i32) {
    %c0_i32 = arith.constant 0 : i32
    %c0_i32_0 = arith.constant 0 : i32
    %c0_i32_1 = arith.constant 0 : i32
    %c0_i32_2 = arith.constant 0 : i32
    return %arg0, %arg1, %c0_i32, %c0_i32_0, %c0_i32_1 : i32, i32, i32, i32, i32
  }
  func.func @transform_1(%arg0: i32, %arg1: i32, %arg2: i32) -> (i32, i32, i32) {
    %c0_i32 = arith.constant 0 : i32
    %c0_i32_0 = arith.constant 0 : i32
    %c0_i32_1 = arith.constant 0 : i32
    return %arg2, %c0_i32, %c0_i32_0 : i32, i32, i32
  }
  func.func @transform_2(%arg0: i32, %arg1: i32, %arg2: i32) -> (i32, i32) {
    %c0_i32 = arith.constant 0 : i32
    %c0_i32_0 = arith.constant 0 : i32
    %c0_i32_1 = arith.constant 0 : i32
    return %c0_i32, %c0_i32_0 : i32, i32
  }
  func.func @transform_3(%arg0: i32, %arg1: i32, %arg2: i32) -> (i32, i32) {
    %c0_i32 = arith.constant 0 : i32
    %c0_i32_0 = arith.constant 0 : i32
    %c0_i32_1 = arith.constant 0 : i32
    return %c0_i32, %c0_i32_0 : i32, i32
  }
  func.func @transform_4(%arg0: i32, %arg1: i32, %arg2: i32) -> (i32, i32, i32, i32) {
    %c1_i32 = arith.constant 1 : i32
    %0 = arith.muli %arg0, %c1_i32 : i32
    %1 = arith.addi %0, %arg1 : i32
    %c0_i32 = arith.constant 0 : i32
    %c0_i32_0 = arith.constant 0 : i32
    %c0_i32_1 = arith.constant 0 : i32
    return %1, %arg2, %c0_i32, %c0_i32_0 : i32, i32, i32, i32
  }
}

</mosaic_0001>

<llo_original>
// kernel: tpu_custom_call.1
$region0: #{tpu_custom_call.1}
  #allocation0 [shape = 'u32[]', space=smem, size = 0x4, offset = 0x4, fixed_abs, tag = 'smem constant byte address 0x4 - core index']
  #allocation1 [shape = 'u32[144,128]{1,0:T(1,128)}', space=vmem, size = 0x12000, scoped, tag = 'internal scratch']
  #allocation6 [shape = 's32[]', space=sflag, size = 0x4, offset = 0, fixed_abs, tag = 'sflag constant byte address 0x0 - dummy sync flag']
  %s0 = inlined_call_operand.vmem [shape: bf16[2,1,10,10,32], index: 0, kind: input, shape index: {}]
  %s1 = inlined_call_operand.hbm [shape: bf16[2,288,256], index: 1, kind: input, shape index: {}]
  %s2 = inlined_call_operand.vmem [shape: f32[1,256], index: 2, kind: input, shape index: {}]
  %s3 = inlined_call_operand.vmem [shape: f32[1,256], index: 3, kind: input, shape index: {}]
  %s4 = inlined_call_operand.hbm [shape: f32[16,2,16,128], index: 4, kind: output, shape index: {}]
  %s5 = sld [smem:[#allocation0]]
  $region53: #{tpu_custom_call.1} parent=0
    _
  %s7 = ssub.s32 1, %s5
  %s8 = scalar_select 0, %s7, %s5
  $region1: #{tpu_custom_call.1} parent=0
    #allocation2 [shape = 'u8[294912]{0}', space=vmem, size = 0x48000, scoped, tag = 'input window, operand 1']
    #allocation3 [shape = 's32[2]{0}', space=sflag, size = 0x8, scoped, tag = 'scoped memory for tpu_custom_call.1']
    #allocation4 [shape = 's32[2]{0}', space=sflag, size = 0x8, scoped, tag = 'scoped memory for tpu_custom_call.1']
    #allocation5 [shape = 'u8[131072]{0}', space=vmem, size = 0x20000, scoped, tag = 'output window, operand 0']
    %9 = vsyncpa [#allocation3], 0
    %s10 = scalar_lea.sflag [#allocation3], 1
    %11 = vsyncpa %s10, 0
    %12 = vsyncpa [#allocation4], 0
    %s13 = scalar_lea.sflag [#allocation4], 1
    %14 = vsyncpa %s13, 0
    loop: start=0, step=1, limit=6
    $region2: #{tpu_custom_call.1} parent=1 // loop_pre_header
      _
    $region3: #{tpu_custom_call.1} parent=1 // loop_header
      %s16 = sphi 0, %s20
      %p17 = scmp.ge.s32.totalorder %s16, 6
      %s23 = sphi 0, %s42
      %s24 = sphi 0, %s38
      %s25 = sphi 0, %s34
      %s26 = sphi 0, %s23
      %s27 = sphi 0, %s24
      %s28 = sphi 0, %s25
      %s29 = sphi 0, %s26
      %s30 = sphi 0, %s27
      %s31 = sphi 0, %s28
      %s47 = sphi 0, %s49
      %s50 = sphi 0, %s47
      %s51 = sphi 0, %s50
      %s67 = sphi 0, %s51
      %s73 = sphi 0, %s75
      %s76 = sphi 0, %s73
      %s77 = sphi 0, %s76
      %s93 = sphi 0, %s77
      %s97 = sphi 0, %s97
      %s99 = sphi 0, %s97
      %s100 = sphi 0, %s99
      %s114 = sphi 0, %s100
      %s118 = sphi 0, %s118
      %s120 = sphi 0, %s118
      %s121 = sphi 0, %s120
      %s135 = sphi 0, %s121
      %s145 = sphi 0, %s147
      %s148 = sphi 0, %s145
      %s149 = sphi 0, %s148
      %s165 = sphi 0, %s149
    $region4: #{tpu_custom_call.1} parent=1 // loop_header_branch
      %19 = sbr.rel (%p17) target = $region8
    $region5: #{tpu_custom_call.1} parent=1 // loop_body
      %s21 = ssub.s32 %s16, 1
      %s22 = ssub.s32 %s16, 2
      %s32 = sadd.s32 1, %s25
      %p33 = scmp.ge.s32.totalorder %s32, 2
      %s34 = scalar_select %p33, 0, %s32
      %s35 = sadd.s32 1, %s24
      %s36 = scalar_select %p33, %s35, %s24
      %p37 = scmp.ge.s32.totalorder %s36, 1
      %s38 = scalar_select %p37, 0, %s36
      %s39 = sadd.s32 1, %s23
      %s40 = scalar_select %p37, %s39, %s23
      %p41 = scmp.ge.s32.totalorder %s40, 2
      %s42 = scalar_select %p41, 0, %s40
      %s43 = ssub.s32 %s23, %s42
      %s44 = ssub.s32 %s24, %s38
      %s45 = sor.u32 %s43, %s44
      %p46 = scmp.eq.s32.totalorder %s45, 0
      %s48 = sadd.s32 %s47, 1
      %s49 = scalar_select %p46, %s47, %s48
      %p52 = pneg %p46
      %p53 = scmp.eq.s32.totalorder %s16, 3
      %p54 = por %p52, %p53
      %p55 = scmp.ne.s32.totalorder %s47, %s50
      %p56 = scmp.eq.s32.totalorder %s16, 0
      %p57 = por %p55, %p56
      %p58 = scmp.ne.s32.totalorder %s47, %s50
      %p59 = scmp.eq.s32.totalorder %s21, 3
      %p60 = por %p58, %p59
      %p61 = scmp.ne.s32.totalorder %s50, %s51
      %p62 = scmp.eq.s32.totalorder %s21, 0
      %p63 = por %p61, %p62
      %p64 = scmp.ne.s32.totalorder %s50, %s51
      %p65 = scmp.eq.s32.totalorder %s22, 3
      %p66 = por %p64, %p65
      %p68 = scmp.ne.s32.totalorder %s51, %s67
      %p69 = scmp.eq.s32.totalorder %s22, 0
      %p70 = por %p68, %p69
      %s71 = ssub.s32 %s25, %s34
      %p72 = scmp.eq.s32.totalorder %s71, 0
      %s74 = sadd.s32 %s73, 1
      %s75 = scalar_select %p72, %s73, %s74
      %p78 = pneg %p72
      %p79 = scmp.eq.s32.totalorder %s16, 3
      %p80 = por %p78, %p79
      %p81 = scmp.ne.s32.totalorder %s73, %s76
      %p82 = scmp.eq.s32.totalorder %s16, 0
      %p83 = por %p81, %p82
      %p84 = scmp.ne.s32.totalorder %s73, %s76
      %p85 = scmp.eq.s32.totalorder %s21, 3
      %p86 = por %p84, %p85
      %p87 = scmp.ne.s32.totalorder %s76, %s77
      %p88 = scmp.eq.s32.totalorder %s21, 0
      %p89 = por %p87, %p88
      %p90 = scmp.ne.s32.totalorder %s76, %s77
      %p91 = scmp.eq.s32.totalorder %s22, 3
      %p92 = por %p90, %p91
      %p94 = scmp.ne.s32.totalorder %s77, %s93
      %p95 = scmp.eq.s32.totalorder %s22, 0
      %p96 = por %p94, %p95
      %s98 = sadd.s32 %s97, 1
      %p101 = scmp.eq.s32.totalorder %s16, 3
      %p102 = scmp.ne.s32.totalorder %s97, %s99
      %p103 = scmp.eq.s32.totalorder %s16, 0
      %p104 = por %p102, %p103
      %p105 = scmp.ne.s32.totalorder %s97, %s99
      %p106 = scmp.eq.s32.totalorder %s21, 3
      %p107 = por %p105, %p106
      %p108 = scmp.ne.s32.totalorder %s99, %s100
      %p109 = scmp.eq.s32.totalorder %s21, 0
      %p110 = por %p108, %p109
      %p111 = scmp.ne.s32.totalorder %s99, %s100
      %p112 = scmp.eq.s32.totalorder %s22, 3
      %p113 = por %p111, %p112
      %p115 = scmp.ne.s32.totalorder %s100, %s114
      %p116 = scmp.eq.s32.totalorder %s22, 0
      %p117 = por %p115, %p116
      %s119 = sadd.s32 %s118, 1
      %p122 = scmp.eq.s32.totalorder %s16, 3
      %p123 = scmp.ne.s32.totalorder %s118, %s120
      %p124 = scmp.eq.s32.totalorder %s16, 0
      %p125 = por %p123, %p124
      %p126 = scmp.ne.s32.totalorder %s118, %s120
      %p127 = scmp.eq.s32.totalorder %s21, 3
      %p128 = por %p126, %p127
      %p129 = scmp.ne.s32.totalorder %s120, %s121
      %p130 = scmp.eq.s32.totalorder %s21, 0
      %p131 = por %p129, %p130
      %p132 = scmp.ne.s32.totalorder %s120, %s121
      %p133 = scmp.eq.s32.totalorder %s22, 3
      %p134 = por %p132, %p133
      %p136 = scmp.ne.s32.totalorder %s121, %s135
      %p137 = scmp.eq.s32.totalorder %s22, 0
      %p138 = por %p136, %p137
      %s139 = sadd.s32 %s23, %s24
      %s140 = sadd.s32 %s42, %s38
      %s141 = ssub.s32 %s139, %s140
      %s142 = ssub.s32 %s25, %s34
      %s143 = sor.u32 %s141, %s142
      %p144 = scmp.eq.s32.totalorder %s143, 0
      %s146 = sadd.s32 %s145, 1
      %s147 = scalar_select %p144, %s145, %s146
      %p150 = pneg %p144
      %p151 = scmp.eq.s32.totalorder %s16, 3
      %p152 = por %p150, %p151
      %p153 = scmp.ne.s32.totalorder %s145, %s148
      %p154 = scmp.eq.s32.totalorder %s16, 0
      %p155 = por %p153, %p154
      %p156 = scmp.ne.s32.totalorder %s145, %s148
      %p157 = scmp.eq.s32.totalorder %s21, 3
      %p158 = por %p156, %p157
      %p159 = scmp.ne.s32.totalorder %s148, %s149
      %p160 = scmp.eq.s32.totalorder %s21, 0
      %p161 = por %p159, %p160
      %p162 = scmp.ne.s32.totalorder %s148, %s149
      %p163 = scmp.eq.s32.totalorder %s22, 3
      %p164 = por %p162, %p163
      %p166 = scmp.ne.s32.totalorder %s149, %s165
      %p167 = scmp.eq.s32.totalorder %s22, 0
      %p168 = por %p166, %p167
      %p169 = scmp.le.s32.totalorder 1, %s16
      %p170 = scmp.lt.s32.totalorder %s16, 5
      %p171 = pnand %p169, %p170
      %p172 = pneg %p171
      // Predicated region
      $region9: #{tpu_custom_call.1} parent=5 // pred_check
        _
      $region10: #{tpu_custom_call.1} parent=5 // pred_check_branch
        %174 = sbr.rel (%p171) target = $region12
      $region11: #{tpu_custom_call.1} parent=5 // pred_region
        %s175 = ssub.s32 %s16, 1
        // Predicated region
        $region13: #{tpu_custom_call.1} parent=11 // pred_check
          %p176 = pneg %p110
        $region14: #{tpu_custom_call.1} parent=11 // pred_check_branch
          %178 = sbr.rel (%p176) target = $region16
        $region15: #{tpu_custom_call.1} parent=11 // pred_region
          _
        $region16: #{tpu_custom_call.1} parent=11 // pred_fallthru
          _
        // Predicated region
        $region17: #{tpu_custom_call.1} parent=11 // pred_check
          %p179 = pneg %p131
        $region18: #{tpu_custom_call.1} parent=11 // pred_check_branch
          %181 = sbr.rel (%p179) target = $region20
        $region19: #{tpu_custom_call.1} parent=11 // pred_region
          _
        $region20: #{tpu_custom_call.1} parent=11 // pred_fallthru
          _
      $region12: #{tpu_custom_call.1} parent=5 // pred_fallthru
        _
      %p182 = scmp.lt.s32.totalorder %s16, 4
      // Predicated region
      $region21: #{tpu_custom_call.1} parent=5 // pred_check
        %p183 = pneg %p182
      $region22: #{tpu_custom_call.1} parent=5 // pred_check_branch
        %185 = sbr.rel (%p183) target = $region24
      $region23: #{tpu_custom_call.1} parent=5 // pred_region
        // Predicated region
        $region25: #{tpu_custom_call.1} parent=23 // pred_check
          %p186 = pneg %p57
        $region26: #{tpu_custom_call.1} parent=23 // pred_check_branch
          %188 = sbr.rel (%p186) target = $region28
        $region27: #{tpu_custom_call.1} parent=23 // pred_region
          %p189 = scmp.lt.s32.totalorder %s23, 1
          %s190 = scalar_select %p189, %s23, 1
          %p191 = scmp.lt.s32.totalorder %s24, 0
          %s192 = scalar_select %p191, %s24, 0
          %s193 = smul.addr %s192, 20
          %s194 = smul.addr %s190, 20
          %s195 = sadd.s32 %s193, %s194
          %s196 = smul.addr %s195, 4
          %s197 = scalar_lea.vmem %s0, %s196
        $region28: #{tpu_custom_call.1} parent=23 // pred_fallthru
          _
        // Predicated region
        $region29: #{tpu_custom_call.1} parent=23 // pred_check
          %p198 = pneg %p83
        $region30: #{tpu_custom_call.1} parent=23 // pred_check_branch
          %200 = sbr.rel (%p198) target = $region32
        $region31: #{tpu_custom_call.1} parent=23 // pred_region
          %s201 = sand.u32 %s73, 1
          %s202 = scalar_lea.sflag [#allocation3], %s201
          %s203 = sand.u32 %s73, 1
          %s204 = smul.addr %s203, 288
          %s205 = scalar_lea.vmem [#allocation2], %s204
          %s207 = ssub.s32 4608, 4608
          %208 = vsyncadd %s202, %s207
          %s209 = smul.addr %s25, 72
          %s210 = smul.addr %s209, 64
          %s211 = scalar_lea.hbm %s1, %s210
          %s212 = sshll.u32 %s205, 4
          %s213 = int_to_ptr.vmem [resolvable:$true] %s212
          %218 = dma.hbm_to_vmem [thread:$0]  %s211, 4608, %s213, %s202, 128, 128, 8
        $region32: #{tpu_custom_call.1} parent=23 // pred_fallthru
          _
      $region24: #{tpu_custom_call.1} parent=5 // pred_fallthru
        _
      %p219 = scmp.le.s32.totalorder 1, %s16
      %p220 = scmp.lt.s32.totalorder %s16, 5
      %p221 = pnand %p219, %p220
      %p222 = pneg %p221
      // Predicated region
      $region33: #{tpu_custom_call.1} parent=5 // pred_check
        _
      $region34: #{tpu_custom_call.1} parent=5 // pred_check_branch
        %224 = sbr.rel (%p221) target = $region36
      $region35: #{tpu_custom_call.1} parent=5 // pred_region
        %s225 = ssub.s32 %s16, 1
        %s226 = sand.u32 %s76, 1
        %s227 = scalar_lea.sflag [#allocation3], %s226
        %s228 = sand.u32 %s76, 1
        %s229 = smul.addr %s228, 288
        %s230 = scalar_lea.vmem [#allocation2], %s229
        // Predicated region
        $region37: #{tpu_custom_call.1} parent=35 // pred_check
          %p231 = pneg %p89
        $region38: #{tpu_custom_call.1} parent=35 // pred_check_branch
          %233 = sbr.rel (%p231) target = $region40
        $region39: #{tpu_custom_call.1} parent=35 // pred_region
          %234 = dma.done %s227, 4608
        $region40: #{tpu_custom_call.1} parent=35 // pred_fallthru
          _
        %p235 = scmp.lt.s32.totalorder %s26, 1
        %s236 = scalar_select %p235, %s26, 1
        %p237 = scmp.lt.s32.totalorder %s27, 0
        %s238 = scalar_select %p237, %s27, 0
        %s239 = smul.addr %s238, 20
        %s240 = smul.addr %s236, 20
        %s241 = sadd.s32 %s239, %s240
        %s242 = smul.addr %s241, 4
        %s243 = scalar_lea.vmem %s0, %s242
        %p244 = pneg %p63
        %p245 = pneg %p60
        %s246 = sand.u32 %s76, 1
        %s247 = scalar_lea.sflag [#allocation3], %s246
        %s248 = sand.u32 %s76, 1
        %s249 = smul.addr %s248, 288
        %s250 = scalar_lea.vmem [#allocation2], %s249
        %p251 = pneg %p89
        %p252 = pneg %p86
        %p253 = pneg %p110
        %p254 = pneg %p107
        %p255 = pneg %p131
        %p256 = pneg %p128
        %p257 = pneg %p161
        %p258 = pneg %p158
        %s259 = sand.u32 %s148, 1
        %s260 = scalar_lea.sflag [#allocation4], %s259
        %s261 = sand.u32 %s148, 1
        %s262 = smul.addr %s261, 128
        %s263 = scalar_lea.vmem [#allocation5], %s262
        %p264 = scmp.lt.s32.totalorder %s26, 1
        %s265 = scalar_select %p264, %s26, 1
        %p266 = scmp.lt.s32.totalorder %s27, 0
        %s267 = scalar_select %p266, %s27, 0
        %s268 = smul.addr %s267, 20
        %s269 = smul.addr %s265, 20
        %s270 = sadd.s32 %s268, %s269
        %s271 = smul.addr %s270, 4
        %s272 = scalar_lea.vmem %s0, %s271
        %s273 = sadd.s32 %s26, %s27
        %s274 = smul.u32 8, %s273
        %v276 = vld [vmem:[%s272] sm:$0xf]
        %v277 = vld [vmem:[%s272 + $0x8] sm:$0xf]
        %v278 = vld [vmem:[%s272 + $0x10] sm:$0xf]
        %v279 = vld [vmem:[%s272 + $0x18] sm:$0xf]
        %v280 = vld [vmem:[%s272 + $0x20] sm:$0xf]
        %v281 = vld [vmem:[%s272 + $0x28] sm:$0xf]
        %v282 = vld [vmem:[%s272 + $0x30] sm:$0xf]
        %v283 = vld [vmem:[%s272 + $0x38] sm:$0xf]
        %v284 = vld [vmem:[%s230] sm:$0xff]
        %v285 = vld [vmem:[%s230 + $0x8] sm:$0xff]
        %v286 = vld [vmem:[%s230 + $0x10] sm:$0xff]
        %v287 = vld [vmem:[%s230 + $0x18] sm:$0xff]
        %v288 = vld [vmem:[%s272 + $0x4] sm:$0x1]
        %v289 = vld [vmem:[%s272 + $0xc] sm:$0x1]
        %v290 = vld [vmem:[%s272 + $0x14] sm:$0x1]
        %v291 = vld [vmem:[%s272 + $0x1c] sm:$0x1]
        %v292 = vld [vmem:[%s272 + $0x24] sm:$0x1]
        %v293 = vld [vmem:[%s272 + $0x2c] sm:$0x1]
        %v294 = vld [vmem:[%s272 + $0x34] sm:$0x1]
        %v295 = vld [vmem:[%s272 + $0x3c] sm:$0x1]
        %vm296 = vsmask.f32 3328
        %vm297 = vsmask.f32 7440
        %vm298 = vmor %vm296, %vm297
        %v300 = vshrl.u32 %v276, 16
        %v302 = vrot.slane %v300, 4
        %v303 = vshll.u32 %v276, 16
        %v305 = vrot.slane %v303, 5
        %v306 = vor.u32 %v302, %v305
        %v307 = vrot.slane %v306, 4
        %v309 = vshll.u32 %v288, 16
        %v311 = vrot.slane %v309, 5
        %v312 = vsel %vm298, %v307, %v311
        %v314 = vshrl.u32 %v277, 16
        %v316 = vrot.slane %v314, 4
        %v317 = vshll.u32 %v277, 16
        %v319 = vrot.slane %v317, 5
        %v320 = vor.u32 %v316, %v319
        %v321 = vrot.slane %v320, 4
        %v323 = vshll.u32 %v289, 16
        %v325 = vrot.slane %v323, 5
        %v326 = vsel %vm298, %v321, %v325
        %v328 = vshrl.u32 %v278, 16
        %v330 = vrot.slane %v328, 4
        %v331 = vshll.u32 %v278, 16
        %v333 = vrot.slane %v331, 5
        %v334 = vor.u32 %v330, %v333
        %v335 = vrot.slane %v334, 4
        %v337 = vshll.u32 %v290, 16
        %v339 = vrot.slane %v337, 5
        %v340 = vsel %vm298, %v335, %v339
        %v342 = vshrl.u32 %v279, 16
        %v344 = vrot.slane %v342, 4
        %v345 = vshll.u32 %v279, 16
        %v347 = vrot.slane %v345, 5
        %v348 = vor.u32 %v344, %v347
        %v349 = vrot.slane %v348, 4
        %v351 = vshll.u32 %v291, 16
        %v353 = vrot.slane %v351, 5
        %v354 = vsel %vm298, %v349, %v353
        %v356 = vshrl.u32 %v280, 16
        %v358 = vrot.slane %v356, 4
        %v359 = vshll.u32 %v280, 16
        %v361 = vrot.slane %v359, 5
        %v362 = vor.u32 %v358, %v361
        %v363 = vrot.slane %v362, 4
        %v365 = vshll.u32 %v292, 16
        %v367 = vrot.slane %v365, 5
        %v368 = vsel %vm298, %v363, %v367
        %v370 = vshrl.u32 %v281, 16
        %v372 = vrot.slane %v370, 4
        %v373 = vshll.u32 %v281, 16
        %v375 = vrot.slane %v373, 5
        %v376 = vor.u32 %v372, %v375
        %v377 = vrot.slane %v376, 4
        %v379 = vshll.u32 %v293, 16
        %v381 = vrot.slane %v379, 5
        %v382 = vsel %vm298, %v377, %v381
        %v384 = vshrl.u32 %v282, 16
        %v386 = vrot.slane %v384, 4
        %v387 = vshll.u32 %v282, 16
        %v389 = vrot.slane %v387, 5
        %v390 = vor.u32 %v386, %v389
        %v391 = vrot.slane %v390, 4
        %v393 = vshll.u32 %v294, 16
        %v395 = vrot.slane %v393, 5
        %v396 = vsel %vm298, %v391, %v395
        %v398 = vshrl.u32 %v283, 16
        %v400 = vrot.slane %v398, 4
        %v401 = vshll.u32 %v283, 16
        %v403 = vrot.slane %v401, 5
        %v404 = vor.u32 %v400, %v403
        %v405 = vrot.slane %v404, 4
        %v407 = vshll.u32 %v295, 16
        %v409 = vrot.slane %v407, 5
        %v410 = vsel %vm298, %v405, %v409
        %v411 = vld [vmem:[%s230 + $0x20] sm:$0xff]
        %v412 = vld [vmem:[%s230 + $0x28] sm:$0xff]
        %v413 = vld [vmem:[%s230 + $0x30] sm:$0xff]
        %v414 = vld [vmem:[%s230 + $0x38] sm:$0xff]
        %v415 = vunpack.c.l.b16 %v312
        %v416 = vunpack.c.l.b16 %v326
        %v417 = vunpack.c.l.b16 %v340
        %v418 = vunpack.c.l.b16 %v354
        %v419 = vunpack.c.l.b16 %v368
        %v420 = vunpack.c.l.b16 %v382
        %v421 = vunpack.c.l.b16 %v396
        %v422 = vunpack.c.l.b16 %v410
        %v423 = vpack.c.b16 %v416, %v415
        %v424 = vpack.c.b16 %v418, %v417
        %v425 = vpack.c.b16 %v420, %v419
        %v426 = vpack.c.b16 %v422, %v421
        %v431 = vunpack.c.l.b16 %v411
        %v432 = vunpack.c.h.b16 %v411
        %v433 = vunpack.c.l.b16 %v412
        %v434 = vunpack.c.h.b16 %v412
        %v435 = vunpack.c.l.b16 %v413
        %v436 = vunpack.c.h.b16 %v413
        %v437 = vunpack.c.l.b16 %v414
        %v438 = vunpack.c.h.b16 %v414
        %v439 = vpack.c.b16 %v433, %v431
        %v440 = vpack.c.b16 %v434, %v432
        %v441 = vpack.c.b16 %v437, %v435
        %v442 = vpack.c.b16 %v438, %v436
        %vm447 = vcmask 261120
        %v449 = vsel %vm447, %v423, 0
        %v452 = vsel %vm447, %v424, 0
        %v455 = vsel %vm447, %v425, 0
        %v458 = vsel %vm447, %v426, 0
        %460 = vmatprep.subr.bf16.mxu0 %v440
        %461 = vmatpush1.bf16.msra.mxu0 %v439
        %462 = vmatprep.subr.bf16.mxu0 %v442
        %463 = vmatpush1.bf16.msra.mxu0 %v441
        %464 = vmatprep.subr.bf16.mxu0 0
        %465 = vmatpush1.bf16.msra.mxu0 0
        %466 = vmatprep.subr.bf16.mxu0 0
        %467 = vmatpush1.bf16.msra.mxu0 0
        %468 = vmatprep.subr.bf16.mxu0 0
        %469 = vmatpush1.bf16.msra.mxu0 0
        %470 = vmatprep.subr.bf16.mxu0 0
        %471 = vmatpush1.bf16.msra.mxu0 0
        %472 = vmatprep.subr.bf16.mxu0 0
        %473 = vmatpush1.bf16.msra.mxu0 0
        %474 = vmatprep.subr.bf16.mxu0 0
        %475 = vmatpush1.bf16.msra.mxu0 0
        %476 = vmatprep.subr.bf16.mxu0 0
        %477 = vmatpush1.bf16.msra.mxu0 0
        %478 = vmatprep.subr.bf16.mxu0 0
        %479 = vmatpush1.bf16.msra.mxu0 0
        %480 = vmatprep.subr.bf16.mxu0 0
        %481 = vmatpush1.bf16.msra.mxu0 0
        %482 = vmatprep.subr.bf16.mxu0 0
        %483 = vmatpush1.bf16.msra.mxu0 0
        %484 = vmatprep.subr.bf16.mxu0 0
        %485 = vmatpush1.bf16.msra.mxu0 0
        %486 = vmatprep.subr.bf16.mxu0 0
        %487 = vmatpush1.bf16.msra.mxu0 0
        %488 = vmatprep.subr.bf16.mxu0 0
        %489 = vmatpush1.bf16.msra.mxu0 0
        %490 = vmatprep.subr.bf16.mxu0 0
        %491 = vmatpush1.bf16.msra.mxu0 0
        %492 = vmatprep.mubr.bf16.mxu0 0
        %493 = vmatmul.mubr.bf16.gmra.mrb[0].mxu0 %v449
        %v494 = vpop.f32.mrb[0].mxu0
        %v495 = vadd.f32 0.0, %v494
        %v496 = vpop.f32.mrb[0].mxu0
        %v497 = vadd.f32 0.0, %v496
        %v498 = vpop.f32.mrb[0].mxu0
        %v499 = vadd.f32 0.0, %v498
        %v500 = vpop.f32.mrb[0].mxu0
        %v501 = vadd.f32 0.0, %v500
        %502 = vmatprep.mubr.bf16.mxu0 0
        %503 = vmatmul.mubr.bf16.gmra.mrb[0].mxu0 %v452
        %v504 = vpop.f32.mrb[0].mxu0
        %v505 = vadd.f32 0.0, %v504
        %v506 = vpop.f32.mrb[0].mxu0
        %v507 = vadd.f32 0.0, %v506
        %v508 = vpop.f32.mrb[0].mxu0
        %v509 = vadd.f32 0.0, %v508
        %v510 = vpop.f32.mrb[0].mxu0
        %v511 = vadd.f32 0.0, %v510
        %512 = vmatprep.mubr.bf16.mxu0 0
        %513 = vmatmul.mubr.bf16.gmra.mrb[0].mxu0 %v455
        %v514 = vpop.f32.mrb[0].mxu0
        %v515 = vadd.f32 0.0, %v514
        %v516 = vpop.f32.mrb[0].mxu0
        %v517 = vadd.f32 0.0, %v516
        %v518 = vpop.f32.mrb[0].mxu0
        %v519 = vadd.f32 0.0, %v518
        %v520 = vpop.f32.mrb[0].mxu0
        %v521 = vadd.f32 0.0, %v520
        %522 = vmatprep.mubr.bf16.mxu0 0
        %523 = vmatmul.mubr.bf16.gmra.mrb[0].mxu0 %v458
        %v524 = vpop.f32.mrb[0].mxu0
        %v525 = vadd.f32 0.0, %v524
        %v526 = vpop.f32.mrb[0].mxu0
        %v527 = vadd.f32 0.0, %v526
        %v528 = vpop.f32.mrb[0].mxu0
        %v529 = vadd.f32 0.0, %v528
        %v530 = vpop.f32.mrb[0].mxu0
        %v531 = vadd.f32 0.0, %v530
        %532 = vdwg.mxu0
        %v541 = vunpack.c.l.b16 %v276
        %v542 = vunpack.c.l.b16 %v277
        %v543 = vunpack.c.l.b16 %v278
        %v544 = vunpack.c.l.b16 %v279
        %v545 = vunpack.c.l.b16 %v280
        %v546 = vunpack.c.l.b16 %v281
        %v547 = vunpack.c.l.b16 %v282
        %v548 = vunpack.c.l.b16 %v283
        %v549 = vpack.c.b16 %v542, %v541
        %v550 = vpack.c.b16 %v544, %v543
        %v551 = vpack.c.b16 %v546, %v545
        %v552 = vpack.c.b16 %v548, %v547
        %v557 = vunpack.c.l.b16 %v284
        %v558 = vunpack.c.h.b16 %v284
        %v559 = vunpack.c.l.b16 %v285
        %v560 = vunpack.c.h.b16 %v285
        %v561 = vunpack.c.l.b16 %v286
        %v562 = vunpack.c.h.b16 %v286
        %v563 = vunpack.c.l.b16 %v287
        %v564 = vunpack.c.h.b16 %v287
        %v565 = vpack.c.b16 %v559, %v557
        %v566 = vpack.c.b16 %v560, %v558
        %v567 = vpack.c.b16 %v563, %v561
        %v568 = vpack.c.b16 %v564, %v562
        %v574 = vsel %vm447, %v549, 0
        %v577 = vsel %vm447, %v550, 0
        %v580 = vsel %vm447, %v551, 0
        %v583 = vsel %vm447, %v552, 0
        %585 = vmatprep.subr.bf16.mxu0 %v566
        %586 = vmatpush1.bf16.msra.mxu0 %v565
        %587 = vmatprep.subr.bf16.mxu0 %v568
        %588 = vmatpush1.bf16.msra.mxu0 %v567
        %589 = vmatprep.subr.bf16.mxu0 0
        %590 = vmatpush1.bf16.msra.mxu0 0
        %591 = vmatprep.subr.bf16.mxu0 0
        %592 = vmatpush1.bf16.msra.mxu0 0
        %593 = vmatprep.subr.bf16.mxu0 0
        %594 = vmatpush1.bf16.msra.mxu0 0
        %595 = vmatprep.subr.bf16.mxu0 0
        %596 = vmatpush1.bf16.msra.mxu0 0
        %597 = vmatprep.subr.bf16.mxu0 0
        %598 = vmatpush1.bf16.msra.mxu0 0
        %599 = vmatprep.subr.bf16.mxu0 0
        %600 = vmatpush1.bf16.msra.mxu0 0
        %601 = vmatprep.subr.bf16.mxu0 0
        %602 = vmatpush1.bf16.msra.mxu0 0
        %603 = vmatprep.subr.bf16.mxu0 0
        %604 = vmatpush1.bf16.msra.mxu0 0
        %605 = vmatprep.subr.bf16.mxu0 0
        %606 = vmatpush1.bf16.msra.mxu0 0
        %607 = vmatprep.subr.bf16.mxu0 0
        %608 = vmatpush1.bf16.msra.mxu0 0
        %609 = vmatprep.subr.bf16.mxu0 0
        %610 = vmatpush1.bf16.msra.mxu0 0
        %611 = vmatprep.subr.bf16.mxu0 0
        %612 = vmatpush1.bf16.msra.mxu0 0
        %613 = vmatprep.subr.bf16.mxu0 0
        %614 = vmatpush1.bf16.msra.mxu0 0
        %615 = vmatprep.subr.bf16.mxu0 0
        %616 = vmatpush1.bf16.msra.mxu0 0
        %617 = vmatprep.mubr.bf16.mxu0 0
        %618 = vmatmul.mubr.bf16.gmra.mrb[0].mxu0 %v574
        %v619 = vpop.f32.mrb[0].mxu0
        %v620 = vadd.f32 %v495, %v619
        %v621 = vpop.f32.mrb[0].mxu0
        %v622 = vadd.f32 %v497, %v621
        %v623 = vpop.f32.mrb[0].mxu0
        %v624 = vadd.f32 %v499, %v623
        %v625 = vpop.f32.mrb[0].mxu0
        %v626 = vadd.f32 %v501, %v625
        %627 = vmatprep.mubr.bf16.mxu0 0
        %628 = vmatmul.mubr.bf16.gmra.mrb[0].mxu0 %v577
        %v629 = vpop.f32.mrb[0].mxu0
        %v630 = vadd.f32 %v505, %v629
        %v631 = vpop.f32.mrb[0].mxu0
        %v632 = vadd.f32 %v507, %v631
        %v633 = vpop.f32.mrb[0].mxu0
        %v634 = vadd.f32 %v509, %v633
        %v635 = vpop.f32.mrb[0].mxu0
        %v636 = vadd.f32 %v511, %v635
        %637 = vmatprep.mubr.bf16.mxu0 0
        %638 = vmatmul.mubr.bf16.gmra.mrb[0].mxu0 %v580
        %v639 = vpop.f32.mrb[0].mxu0
        %v640 = vadd.f32 %v515, %v639
        %v641 = vpop.f32.mrb[0].mxu0
        %v642 = vadd.f32 %v517, %v641
        %v643 = vpop.f32.mrb[0].mxu0
        %v644 = vadd.f32 %v519, %v643
        %v645 = vpop.f32.mrb[0].mxu0
        %v646 = vadd.f32 %v521, %v645
        %647 = vmatprep.mubr.bf16.mxu0 0
        %648 = vmatmul.mubr.bf16.gmra.mrb[0].mxu0 %v583
        %v649 = vpop.f32.mrb[0].mxu0
        %v650 = vadd.f32 %v525, %v649
        %v651 = vpop.f32.mrb[0].mxu0
        %v652 = vadd.f32 %v527, %v651
        %v653 = vpop.f32.mrb[0].mxu0
        %v654 = vadd.f32 %v529, %v653
        %v655 = vpop.f32.mrb[0].mxu0
        %v656 = vadd.f32 %v531, %v655
        %657 = vdwg.mxu0
        %v658 = vld [vmem:[%s272] sm:$0xe]
        %v659 = vld [vmem:[%s272 + $0x8] sm:$0xe]
        %v660 = vld [vmem:[%s272 + $0x10] sm:$0xe]
        %v661 = vld [vmem:[%s272 + $0x18] sm:$0xe]
        %v662 = vld [vmem:[%s272 + $0x20] sm:$0xe]
        %v663 = vld [vmem:[%s272 + $0x28] sm:$0xe]
        %v664 = vld [vmem:[%s272 + $0x30] sm:$0xe]
        %v665 = vld [vmem:[%s272 + $0x38] sm:$0xe]
        %vm682 = vcmask 1042432
        %vm683 = vcmask 1046532
        %vm684 = vmor %vm682, %vm683
        %v685 = vrot.slane %v658, 5
        %v686 = vrot.slane %v685, 4
        %v687 = vrot.slane %v288, 5
        %v688 = vsel %vm684, %v686, %v687
        %v689 = vrot.slane %v659, 5
        %v690 = vrot.slane %v689, 4
        %v691 = vrot.slane %v289, 5
        %v692 = vsel %vm684, %v690, %v691
        %v693 = vrot.slane %v660, 5
        %v694 = vrot.slane %v693, 4
        %v695 = vrot.slane %v290, 5
        %v696 = vsel %vm684, %v694, %v695
        %v697 = vrot.slane %v661, 5
        %v698 = vrot.slane %v697, 4
        %v699 = vrot.slane %v291, 5
        %v700 = vsel %vm684, %v698, %v699
        %v701 = vrot.slane %v662, 5
        %v702 = vrot.slane %v701, 4
        %v703 = vrot.slane %v292, 5
        %v704 = vsel %vm684, %v702, %v703
        %v705 = vrot.slane %v663, 5
        %v706 = vrot.slane %v705, 4
        %v707 = vrot.slane %v293, 5
        %v708 = vsel %vm684, %v706, %v707
        %v709 = vrot.slane %v664, 5
        %v710 = vrot.slane %v709, 4
        %v711 = vrot.slane %v294, 5
        %v712 = vsel %vm684, %v710, %v711
        %v713 = vrot.slane %v665, 5
        %v714 = vrot.slane %v713, 4
        %v715 = vrot.slane %v295, 5
        %v716 = vsel %vm684, %v714, %v715
        %v717 = vld [vmem:[%s230 + $0x40] sm:$0xff]
        %v718 = vld [vmem:[%s230 + $0x48] sm:$0xff]
        %v719 = vld [vmem:[%s230 + $0x50] sm:$0xff]
        %v720 = vld [vmem:[%s230 + $0x58] sm:$0xff]
        %v721 = vunpack.c.l.b16 %v688
        %v722 = vunpack.c.l.b16 %v692
        %v723 = vunpack.c.l.b16 %v696
        %v724 = vunpack.c.l.b16 %v700
        %v725 = vunpack.c.l.b16 %v704
        %v726 = vunpack.c.l.b16 %v708
        %v727 = vunpack.c.l.b16 %v712
        %v728 = vunpack.c.l.b16 %v716
        %v729 = vpack.c.b16 %v722, %v721
        %v730 = vpack.c.b16 %v724, %v723
        %v731 = vpack.c.b16 %v726, %v725
        %v732 = vpack.c.b16 %v728, %v727
        %v737 = vunpack.c.l.b16 %v717
        %v738 = vunpack.c.h.b16 %v717
        %v739 = vunpack.c.l.b16 %v718
        %v740 = vunpack.c.h.b16 %v718
        %v741 = vunpack.c.l.b16 %v719
        %v742 = vunpack.c.h.b16 %v719
        %v743 = vunpack.c.l.b16 %v720
        %v744 = vunpack.c.h.b16 %v720
        %v745 = vpack.c.b16 %v739, %v737
        %v746 = vpack.c.b16 %v740, %v738
        %v747 = vpack.c.b16 %v743, %v741
        %v748 = vpack.c.b16 %v744, %v742
        %v754 = vsel %vm447, %v729, 0
        %v757 = vsel %vm447, %v730, 0
        %v760 = vsel %vm447, %v731, 0
        %v763 = vsel %vm447, %v732, 0
        %765 = vmatprep.subr.bf16.mxu0 %v746
        %766 = vmatpush1.bf16.msra.mxu0 %v745
        %767 = vmatprep.subr.bf16.mxu0 %v748
        %768 = vmatpush1.bf16.msra.mxu0 %v747
        %769 = vmatprep.subr.bf16.mxu0 0
        %770 = vmatpush1.bf16.msra.mxu0 0
        %771 = vmatprep.subr.bf16.mxu0 0
        %772 = vmatpush1.bf16.msra.mxu0 0
        %773 = vmatprep.subr.bf16.mxu0 0
        %774 = vmatpush1.bf16.msra.mxu0 0
        %775 = vmatprep.subr.bf16.mxu0 0
        %776 = vmatpush1.bf16.msra.mxu0 0
        %777 = vmatprep.subr.bf16.mxu0 0
        %778 = vmatpush1.bf16.msra.mxu0 0
        %779 = vmatprep.subr.bf16.mxu0 0
        %780 = vmatpush1.bf16.msra.mxu0 0
        %781 = vmatprep.subr.bf16.mxu0 0
        %782 = vmatpush1.bf16.msra.mxu0 0
        %783 = vmatprep.subr.bf16.mxu0 0
        %784 = vmatpush1.bf16.msra.mxu0 0
        %785 = vmatprep.subr.bf16.mxu0 0
        %786 = vmatpush1.bf16.msra.mxu0 0
        %787 = vmatprep.subr.bf16.mxu0 0
        %788 = vmatpush1.bf16.msra.mxu0 0
        %789 = vmatprep.subr.bf16.mxu0 0
        %790 = vmatpush1.bf16.msra.mxu0 0
        %791 = vmatprep.subr.bf16.mxu0 0
        %792 = vmatpush1.bf16.msra.mxu0 0
        %793 = vmatprep.subr.bf16.mxu0 0
        %794 = vmatpush1.bf16.msra.mxu0 0
        %795 = vmatprep.subr.bf16.mxu0 0
        %796 = vmatpush1.bf16.msra.mxu0 0
        %797 = vmatprep.mubr.bf16.mxu0 0
        %798 = vmatmul.mubr.bf16.gmra.mrb[0].mxu0 %v754
        %v799 = vpop.f32.mrb[0].mxu0
        %v800 = vadd.f32 0.0, %v799
        %v801 = vpop.f32.mrb[0].mxu0
        %v802 = vadd.f32 0.0, %v801
        %v803 = vpop.f32.mrb[0].mxu0
        %v804 = vadd.f32 0.0, %v803
        %v805 = vpop.f32.mrb[0].mxu0
        %v806 = vadd.f32 0.0, %v805
        %807 = vmatprep.mubr.bf16.mxu0 0
        %808 = vmatmul.mubr.bf16.gmra.mrb[0].mxu0 %v757
        %v809 = vpop.f32.mrb[0].mxu0
        %v810 = vadd.f32 0.0, %v809
        %v811 = vpop.f32.mrb[0].mxu0
        %v812 = vadd.f32 0.0, %v811
        %v813 = vpop.f32.mrb[0].mxu0
        %v814 = vadd.f32 0.0, %v813
        %v815 = vpop.f32.mrb[0].mxu0
        %v816 = vadd.f32 0.0, %v815
        %817 = vmatprep.mubr.bf16.mxu0 0
        %818 = vmatmul.mubr.bf16.gmra.mrb[0].mxu0 %v760
        %v819 = vpop.f32.mrb[0].mxu0
        %v820 = vadd.f32 0.0, %v819
        %v821 = vpop.f32.mrb[0].mxu0
        %v822 = vadd.f32 0.0, %v821
        %v823 = vpop.f32.mrb[0].mxu0
        %v824 = vadd.f32 0.0, %v823
        %v825 = vpop.f32.mrb[0].mxu0
        %v826 = vadd.f32 0.0, %v825
        %827 = vmatprep.mubr.bf16.mxu0 0
        %828 = vmatmul.mubr.bf16.gmra.mrb[0].mxu0 %v763
        %v829 = vpop.f32.mrb[0].mxu0
        %v830 = vadd.f32 0.0, %v829
        %v831 = vpop.f32.mrb[0].mxu0
        %v832 = vadd.f32 0.0, %v831
        %v833 = vpop.f32.mrb[0].mxu0
        %v834 = vadd.f32 0.0, %v833
        %v835 = vpop.f32.mrb[0].mxu0
        %v836 = vadd.f32 0.0, %v835
        %837 = vdwg.mxu0
        %v838 = vadd.f32 %v620, %v800
        %v839 = vadd.f32 %v622, %v802
        %v840 = vadd.f32 %v624, %v804
        %v841 = vadd.f32 %v626, %v806
        %v842 = vadd.f32 %v630, %v810
        %v843 = vadd.f32 %v632, %v812
        %v844 = vadd.f32 %v634, %v814
        %v845 = vadd.f32 %v636, %v816
        %v846 = vadd.f32 %v640, %v820
        %v847 = vadd.f32 %v642, %v822
        %v848 = vadd.f32 %v644, %v824
        %v849 = vadd.f32 %v646, %v826
        %v850 = vadd.f32 %v650, %v830
        %v851 = vadd.f32 %v652, %v832
        %v852 = vadd.f32 %v654, %v834
        %v853 = vadd.f32 %v656, %v836
        %s854 = scalar_lea.vmem %s272, 8
        %v855 = vld [vmem:[%s854] sm:$0xf]
        %v856 = vld [vmem:[%s854 + $0x8] sm:$0xf]
        %v857 = vld [vmem:[%s854 + $0x10] sm:$0xf]
        %v858 = vld [vmem:[%s854 + $0x18] sm:$0xf]
        %v859 = vld [vmem:[%s854 + $0x20] sm:$0xf]
        %v860 = vld [vmem:[%s854 + $0x28] sm:$0xf]
        %v861 = vld [vmem:[%s854 + $0x30] sm:$0xf]
        %v862 = vld [vmem:[%s854 + $0x38] sm:$0xf]
        %v863 = vld [vmem:[%s230 + $0x60] sm:$0xff]
        %v864 = vld [vmem:[%s230 + $0x68] sm:$0xff]
        %v865 = vld [vmem:[%s230 + $0x70] sm:$0xff]
        %v866 = vld [vmem:[%s230 + $0x78] sm:$0xff]
        %v875 = vunpack.c.l.b16 %v855
        %v876 = vunpack.c.l.b16 %v856
        %v877 = vunpack.c.l.b16 %v857
        %v878 = vunpack.c.l.b16 %v858
        %v879 = vunpack.c.l.b16 %v859
        %v880 = vunpack.c.l.b16 %v860
        %v881 = vunpack.c.l.b16 %v861
        %v882 = vunpack.c.l.b16 %v862
        %v883 = vpack.c.b16 %v876, %v875
        %v884 = vpack.c.b16 %v878, %v877
        %v885 = vpack.c.b16 %v880, %v879
        %v886 = vpack.c.b16 %v882, %v881
        %v891 = vunpack.c.l.b16 %v863
        %v892 = vunpack.c.h.b16 %v863
        %v893 = vunpack.c.l.b16 %v864
        %v894 = vunpack.c.h.b16 %v864
        %v895 = vunpack.c.l.b16 %v865
        %v896 = vunpack.c.h.b16 %v865
        %v897 = vunpack.c.l.b16 %v866
        %v898 = vunpack.c.h.b16 %v866
        %v899 = vpack.c.b16 %v893, %v891
        %v900 = vpack.c.b16 %v894, %v892
        %v901 = vpack.c.b16 %v897, %v895
        %v902 = vpack.c.b16 %v898, %v896
        %v908 = vsel %vm447, %v883, 0
        %v911 = vsel %vm447, %v884, 0
        %v914 = vsel %vm447, %v885, 0
        %v917 = vsel %vm447, %v886, 0
        %919 = vmatprep.subr.bf16.mxu0 %v900
        %920 = vmatpush1.bf16.msra.mxu0 %v899
        %921 = vmatprep.subr.bf16.mxu0 %v902
        %922 = vmatpush1.bf16.msra.mxu0 %v901
        %923 = vmatprep.subr.bf16.mxu0 0
        %924 = vmatpush1.bf16.msra.mxu0 0
        %925 = vmatprep.subr.bf16.mxu0 0
        %926 = vmatpush1.bf16.msra.mxu0 0
        %927 = vmatprep.subr.bf16.mxu0 0
        %928 = vmatpush1.bf16.msra.mxu0 0
        %929 = vmatprep.subr.bf16.mxu0 0
        %930 = vmatpush1.bf16.msra.mxu0 0
        %931 = vmatprep.subr.bf16.mxu0 0
        %932 = vmatpush1.bf16.msra.mxu0 0
        %933 = vmatprep.subr.bf16.mxu0 0
        %934 = vmatpush1.bf16.msra.mxu0 0
        %935 = vmatprep.subr.bf16.mxu0 0
        %936 = vmatpush1.bf16.msra.mxu0 0
        %937 = vmatprep.subr.bf16.mxu0 0
        %938 = vmatpush1.bf16.msra.mxu0 0
        %939 = vmatprep.subr.bf16.mxu0 0
        %940 = vmatpush1.bf16.msra.mxu0 0
        %941 = vmatprep.subr.bf16.mxu0 0
        %942 = vmatpush1.bf16.msra.mxu0 0
        %943 = vmatprep.subr.bf16.mxu0 0
        %944 = vmatpush1.bf16.msra.mxu0 0
        %945 = vmatprep.subr.bf16.mxu0 0
        %946 = vmatpush1.bf16.msra.mxu0 0
        %947 = vmatprep.subr.bf16.mxu0 0
        %948 = vmatpush1.bf16.msra.mxu0 0
        %949 = vmatprep.subr.bf16.mxu0 0
        %950 = vmatpush1.bf16.msra.mxu0 0
        %951 = vmatprep.mubr.bf16.mxu0 0
        %952 = vmatmul.mubr.bf16.gmra.mrb[0].mxu0 %v908
        %v953 = vpop.f32.mrb[0].mxu0
        %v954 = vadd.f32 0.0, %v953
        %v955 = vpop.f32.mrb[0].mxu0
        %v956 = vadd.f32 0.0, %v955
        %v957 = vpop.f32.mrb[0].mxu0
        %v958 = vadd.f32 0.0, %v957
        %v959 = vpop.f32.mrb[0].mxu0
        %v960 = vadd.f32 0.0, %v959
        %961 = vmatprep.mubr.bf16.mxu0 0
        %962 = vmatmul.mubr.bf16.gmra.mrb[0].mxu0 %v911
        %v963 = vpop.f32.mrb[0].mxu0
        %v964 = vadd.f32 0.0, %v963
        %v965 = vpop.f32.mrb[0].mxu0
        %v966 = vadd.f32 0.0, %v965
        %v967 = vpop.f32.mrb[0].mxu0
        %v968 = vadd.f32 0.0, %v967
        %v969 = vpop.f32.mrb[0].mxu0
        %v970 = vadd.f32 0.0, %v969
        %971 = vmatprep.mubr.bf16.mxu0 0
        %972 = vmatmul.mubr.bf16.gmra.mrb[0].mxu0 %v914
        %v973 = vpop.f32.mrb[0].mxu0
        %v974 = vadd.f32 0.0, %v973
        %v975 = vpop.f32.mrb[0].mxu0
        %v976 = vadd.f32 0.0, %v975
        %v977 = vpop.f32.mrb[0].mxu0
        %v978 = vadd.f32 0.0, %v977
        %v979 = vpop.f32.mrb[0].mxu0
        %v980 = vadd.f32 0.0, %v979
        %981 = vmatprep.mubr.bf16.mxu0 0
        %982 = vmatmul.mubr.bf16.gmra.mrb[0].mxu0 %v917
        %v983 = vpop.f32.mrb[0].mxu0
        %v984 = vadd.f32 0.0, %v983
        %v985 = vpop.f32.mrb[0].mxu0
        %v986 = vadd.f32 0.0, %v985
        %v987 = vpop.f32.mrb[0].mxu0
        %v988 = vadd.f32 0.0, %v987
        %v989 = vpop.f32.mrb[0].mxu0
        %v990 = vadd.f32 0.0, %v989
        %991 = vdwg.mxu0
        %v992 = vadd.f32 %v838, %v954
        %v993 = vadd.f32 %v839, %v956
        %v994 = vadd.f32 %v840, %v958
        %v995 = vadd.f32 %v841, %v960
        %v996 = vadd.f32 %v842, %v964
        %v997 = vadd.f32 %v843, %v966
        %v998 = vadd.f32 %v844, %v968
        %v999 = vadd.f32 %v845, %v970
        %v1000 = vadd.f32 %v846, %v974
        %v1001 = vadd.f32 %v847, %v976
        %v1002 = vadd.f32 %v848, %v978
        %v1003 = vadd.f32 %v849, %v980
        %v1004 = vadd.f32 %v850, %v984
        %v1005 = vadd.f32 %v851, %v986
        %v1006 = vadd.f32 %v852, %v988
        %v1007 = vadd.f32 %v853, %v990
        %v1008 = vld [vmem:[%s854] sm:$0xf]
        %v1009 = vld [vmem:[%s854 + $0x4] sm:$0x1]
        %v1010 = vld [vmem:[%s854 + $0x8] sm:$0xf]
        %v1011 = vld [vmem:[%s854 + $0xc] sm:$0x1]
        %v1012 = vld [vmem:[%s854 + $0x10] sm:$0xf]
        %v1013 = vld [vmem:[%s854 + $0x14] sm:$0x1]
        %v1014 = vld [vmem:[%s854 + $0x18] sm:$0xf]
        %v1015 = vld [vmem:[%s854 + $0x1c] sm:$0x1]
        %v1016 = vld [vmem:[%s854 + $0x20] sm:$0xf]
        %v1017 = vld [vmem:[%s854 + $0x24] sm:$0x1]
        %v1018 = vld [vmem:[%s854 + $0x28] sm:$0xf]
        %v1019 = vld [vmem:[%s854 + $0x2c] sm:$0x1]
        %v1020 = vld [vmem:[%s854 + $0x30] sm:$0xf]
        %v1021 = vld [vmem:[%s854 + $0x34] sm:$0x1]
        %v1022 = vld [vmem:[%s854 + $0x38] sm:$0xf]
        %v1023 = vld [vmem:[%s854 + $0x3c] sm:$0x1]
        %v1025 = vshrl.u32 %v1008, 16
        %v1027 = vrot.slane %v1025, 4
        %v1028 = vshll.u32 %v1008, 16
        %v1030 = vrot.slane %v1028, 5
        %v1031 = vor.u32 %v1027, %v1030
        %v1032 = vrot.slane %v1031, 4
        %v1034 = vshll.u32 %v1009, 16
        %v1036 = vrot.slane %v1034, 5
        %v1037 = vsel %vm298, %v1032, %v1036
        %v1039 = vshrl.u32 %v1010, 16
        %v1041 = vrot.slane %v1039, 4
        %v1042 = vshll.u32 %v1010, 16
        %v1044 = vrot.slane %v1042, 5
        %v1045 = vor.u32 %v1041, %v1044
        %v1046 = vrot.slane %v1045, 4
        %v1048 = vshll.u32 %v1011, 16
        %v1050 = vrot.slane %v1048, 5
        %v1051 = vsel %vm298, %v1046, %v1050
        %v1053 = vshrl.u32 %v1012, 16
        %v1055 = vrot.slane %v1053, 4
        %v1056 = vshll.u32 %v1012, 16
        %v1058 = vrot.slane %v1056, 5
        %v1059 = vor.u32 %v1055, %v1058
        %v1060 = vrot.slane %v1059, 4
        %v1062 = vshll.u32 %v1013, 16
        %v1064 = vrot.slane %v1062, 5
        %v1065 = vsel %vm298, %v1060, %v1064
        %v1067 = vshrl.u32 %v1014, 16
        %v1069 = vrot.slane %v1067, 4
        %v1070 = vshll.u32 %v1014, 16
        %v1072 = vrot.slane %v1070, 5
        %v1073 = vor.u32 %v1069, %v1072
        %v1074 = vrot.slane %v1073, 4
        %v1076 = vshll.u32 %v1015, 16
        %v1078 = vrot.slane %v1076, 5
        %v1079 = vsel %vm298, %v1074, %v1078
        %v1081 = vshrl.u32 %v1016, 16
        %v1083 = vrot.slane %v1081, 4
        %v1084 = vshll.u32 %v1016, 16
        %v1086 = vrot.slane %v1084, 5
        %v1087 = vor.u32 %v1083, %v1086
        %v1088 = vrot.slane %v1087, 4
        %v1090 = vshll.u32 %v1017, 16
        %v1092 = vrot.slane %v1090, 5
        %v1093 = vsel %vm298, %v1088, %v1092
        %v1095 = vshrl.u32 %v1018, 16
        %v1097 = vrot.slane %v1095, 4
        %v1098 = vshll.u32 %v1018, 16
        %v1100 = vrot.slane %v1098, 5
        %v1101 = vor.u32 %v1097, %v1100
        %v1102 = vrot.slane %v1101, 4
        %v1104 = vshll.u32 %v1019, 16
        %v1106 = vrot.slane %v1104, 5
        %v1107 = vsel %vm298, %v1102, %v1106
        %v1109 = vshrl.u32 %v1020, 16
        %v1111 = vrot.slane %v1109, 4
        %v1112 = vshll.u32 %v1020, 16
        %v1114 = vrot.slane %v1112, 5
        %v1115 = vor.u32 %v1111, %v1114
        %v1116 = vrot.slane %v1115, 4
        %v1118 = vshll.u32 %v1021, 16
        %v1120 = vrot.slane %v1118, 5
        %v1121 = vsel %vm298, %v1116, %v1120
        %v1123 = vshrl.u32 %v1022, 16
        %v1125 = vrot.slane %v1123, 4
        %v1126 = vshll.u32 %v1022, 16
        %v1128 = vrot.slane %v1126, 5
        %v1129 = vor.u32 %v1125, %v1128
        %v1130 = vrot.slane %v1129, 4
        %v1132 = vshll.u32 %v1023, 16
        %v1134 = vrot.slane %v1132, 5
        %v1135 = vsel %vm298, %v1130, %v1134
        %v1136 = vld [vmem:[%s230 + $0x80] sm:$0xff]
        %v1137 = vld [vmem:[%s230 + $0x88] sm:$0xff]
        %v1138 = vld [vmem:[%s230 + $0x90] sm:$0xff]
        %v1139 = vld [vmem:[%s230 + $0x98] sm:$0xff]
        %v1140 = vunpack.c.l.b16 %v1037
        %v1141 = vunpack.c.l.b16 %v1051
        %v1142 = vunpack.c.l.b16 %v1065
        %v1143 = vunpack.c.l.b16 %v1079
        %v1144 = vunpack.c.l.b16 %v1093
        %v1145 = vunpack.c.l.b16 %v1107
        %v1146 = vunpack.c.l.b16 %v1121
        %v1147 = vunpack.c.l.b16 %v1135
        %v1148 = vpack.c.b16 %v1141, %v1140
        %v1149 = vpack.c.b16 %v1143, %v1142
        %v1150 = vpack.c.b16 %v1145, %v1144
        %v1151 = vpack.c.b16 %v1147, %v1146
        %v1156 = vunpack.c.l.b16 %v1136
        %v1157 = vunpack.c.h.b16 %v1136
        %v1158 = vunpack.c.l.b16 %v1137
        %v1159 = vunpack.c.h.b16 %v1137
        %v1160 = vunpack.c.l.b16 %v1138
        %v1161 = vunpack.c.h.b16 %v1138
        %v1162 = vunpack.c.l.b16 %v1139
        %v1163 = vunpack.c.h.b16 %v1139
        %v1164 = vpack.c.b16 %v1158, %v1156
        %v1165 = vpack.c.b16 %v1159, %v1157
        %v1166 = vpack.c.b16 %v1162, %v1160
        %v1167 = vpack.c.b16 %v1163, %v1161
        %v1173 = vsel %vm447, %v1148, 0
        %v1176 = vsel %vm447, %v1149, 0
        %v1179 = vsel %vm447, %v1150, 0
        %v1182 = vsel %vm447, %v1151, 0
        %1184 = vmatprep.subr.bf16.mxu0 %v1165
        %1185 = vmatpush1.bf16.msra.mxu0 %v1164
        %1186 = vmatprep.subr.bf16.mxu0 %v1167
        %1187 = vmatpush1.bf16.msra.mxu0 %v1166
        %1188 = vmatprep.subr.bf16.mxu0 0
        %1189 = vmatpush1.bf16.msra.mxu0 0
        %1190 = vmatprep.subr.bf16.mxu0 0
        %1191 = vmatpush1.bf16.msra.mxu0 0
        %1192 = vmatprep.subr.bf16.mxu0 0
        %1193 = vmatpush1.bf16.msra.mxu0 0
        %1194 = vmatprep.subr.bf16.mxu0 0
        %1195 = vmatpush1.bf16.msra.mxu0 0
        %1196 = vmatprep.subr.bf16.mxu0 0
        %1197 = vmatpush1.bf16.msra.mxu0 0
        %1198 = vmatprep.subr.bf16.mxu0 0
        %1199 = vmatpush1.bf16.msra.mxu0 0
        %1200 = vmatprep.subr.bf16.mxu0 0
        %1201 = vmatpush1.bf16.msra.mxu0 0
        %1202 = vmatprep.subr.bf16.mxu0 0
        %1203 = vmatpush1.bf16.msra.mxu0 0
        %1204 = vmatprep.subr.bf16.mxu0 0
        %1205 = vmatpush1.bf16.msra.mxu0 0
        %1206 = vmatprep.subr.bf16.mxu0 0
        %1207 = vmatpush1.bf16.msra.mxu0 0
        %1208 = vmatprep.subr.bf16.mxu0 0
        %1209 = vmatpush1.bf16.msra.mxu0 0
        %1210 = vmatprep.subr.bf16.mxu0 0
        %1211 = vmatpush1.bf16.msra.mxu0 0
        %1212 = vmatprep.subr.bf16.mxu0 0
        %1213 = vmatpush1.bf16.msra.mxu0 0
        %1214 = vmatprep.subr.bf16.mxu0 0
        %1215 = vmatpush1.bf16.msra.mxu0 0
        %1216 = vmatprep.mubr.bf16.mxu0 0
        %1217 = vmatmul.mubr.bf16.gmra.mrb[0].mxu0 %v1173
        %v1218 = vpop.f32.mrb[0].mxu0
        %v1219 = vadd.f32 0.0, %v1218
        %v1220 = vpop.f32.mrb[0].mxu0
        %v1221 = vadd.f32 0.0, %v1220
        %v1222 = vpop.f32.mrb[0].mxu0
        %v1223 = vadd.f32 0.0, %v1222
        %v1224 = vpop.f32.mrb[0].mxu0
        %v1225 = vadd.f32 0.0, %v1224
        %1226 = vmatprep.mubr.bf16.mxu0 0
        %1227 = vmatmul.mubr.bf16.gmra.mrb[0].mxu0 %v1176
        %v1228 = vpop.f32.mrb[0].mxu0
        %v1229 = vadd.f32 0.0, %v1228
        %v1230 = vpop.f32.mrb[0].mxu0
        %v1231 = vadd.f32 0.0, %v1230
        %v1232 = vpop.f32.mrb[0].mxu0
        %v1233 = vadd.f32 0.0, %v1232
        %v1234 = vpop.f32.mrb[0].mxu0
        %v1235 = vadd.f32 0.0, %v1234
        %1236 = vmatprep.mubr.bf16.mxu0 0
        %1237 = vmatmul.mubr.bf16.gmra.mrb[0].mxu0 %v1179
        %v1238 = vpop.f32.mrb[0].mxu0
        %v1239 = vadd.f32 0.0, %v1238
        %v1240 = vpop.f32.mrb[0].mxu0
        %v1241 = vadd.f32 0.0, %v1240
        %v1242 = vpop.f32.mrb[0].mxu0
        %v1243 = vadd.f32 0.0, %v1242
        %v1244 = vpop.f32.mrb[0].mxu0
        %v1245 = vadd.f32 0.0, %v1244
        %1246 = vmatprep.mubr.bf16.mxu0 0
        %1247 = vmatmul.mubr.bf16.gmra.mrb[0].mxu0 %v1182
        %v1248 = vpop.f32.mrb[0].mxu0
        %v1249 = vadd.f32 0.0, %v1248
        %v1250 = vpop.f32.mrb[0].mxu0
        %v1251 = vadd.f32 0.0, %v1250
        %v1252 = vpop.f32.mrb[0].mxu0
        %v1253 = vadd.f32 0.0, %v1252
        %v1254 = vpop.f32.mrb[0].mxu0
        %v1255 = vadd.f32 0.0, %v1254
        %1256 = vdwg.mxu0
        %v1257 = vadd.f32 %v992, %v1219
        %v1258 = vadd.f32 %v993, %v1221
        %v1259 = vadd.f32 %v994, %v1223
        %v1260 = vadd.f32 %v995, %v1225
        %v1261 = vadd.f32 %v996, %v1229
        %v1262 = vadd.f32 %v997, %v1231
        %v1263 = vadd.f32 %v998, %v1233
        %v1264 = vadd.f32 %v999, %v1235
        %v1265 = vadd.f32 %v1000, %v1239
        %v1266 = vadd.f32 %v1001, %v1241
        %v1267 = vadd.f32 %v1002, %v1243
        %v1268 = vadd.f32 %v1003, %v1245
        %v1269 = vadd.f32 %v1004, %v1249
        %v1270 = vadd.f32 %v1005, %v1251
        %v1271 = vadd.f32 %v1006, %v1253
        %v1272 = vadd.f32 %v1007, %v1255
        %v1273 = vld [vmem:[%s854] sm:$0xe]
        %v1274 = vld [vmem:[%s854 + $0x8] sm:$0xe]
        %v1275 = vld [vmem:[%s854 + $0x10] sm:$0xe]
        %v1276 = vld [vmem:[%s854 + $0x18] sm:$0xe]
        %v1277 = vld [vmem:[%s854 + $0x20] sm:$0xe]
        %v1278 = vld [vmem:[%s854 + $0x28] sm:$0xe]
        %v1279 = vld [vmem:[%s854 + $0x30] sm:$0xe]
        %v1280 = vld [vmem:[%s854 + $0x38] sm:$0xe]
        %v1297 = vrot.slane %v1273, 5
        %v1298 = vrot.slane %v1297, 4
        %v1299 = vrot.slane %v1009, 5
        %v1300 = vsel %vm684, %v1298, %v1299
        %v1301 = vrot.slane %v1274, 5
        %v1302 = vrot.slane %v1301, 4
        %v1303 = vrot.slane %v1011, 5
        %v1304 = vsel %vm684, %v1302, %v1303
        %v1305 = vrot.slane %v1275, 5
        %v1306 = vrot.slane %v1305, 4
        %v1307 = vrot.slane %v1013, 5
        %v1308 = vsel %vm684, %v1306, %v1307
        %v1309 = vrot.slane %v1276, 5
        %v1310 = vrot.slane %v1309, 4
        %v1311 = vrot.slane %v1015, 5
        %v1312 = vsel %vm684, %v1310, %v1311
        %v1313 = vrot.slane %v1277, 5
        %v1314 = vrot.slane %v1313, 4
        %v1315 = vrot.slane %v1017, 5
        %v1316 = vsel %vm684, %v1314, %v1315
        %v1317 = vrot.slane %v1278, 5
        %v1318 = vrot.slane %v1317, 4
        %v1319 = vrot.slane %v1019, 5
        %v1320 = vsel %vm684, %v1318, %v1319
        %v1321 = vrot.slane %v1279, 5
        %v1322 = vrot.slane %v1321, 4
        %v1323 = vrot.slane %v1021, 5
        %v1324 = vsel %vm684, %v1322, %v1323
        %v1325 = vrot.slane %v1280, 5
        %v1326 = vrot.slane %v1325, 4
        %v1327 = vrot.slane %v1023, 5
        %v1328 = vsel %vm684, %v1326, %v1327
        %v1329 = vld [vmem:[%s230 + $0xa0] sm:$0xff]
        %v1330 = vld [vmem:[%s230 + $0xa8] sm:$0xff]
        %v1331 = vld [vmem:[%s230 + $0xb0] sm:$0xff]
        %v1332 = vld [vmem:[%s230 + $0xb8] sm:$0xff]
        %v1333 = vunpack.c.l.b16 %v1300
        %v1334 = vunpack.c.l.b16 %v1304
        %v1335 = vunpack.c.l.b16 %v1308
        %v1336 = vunpack.c.l.b16 %v1312
        %v1337 = vunpack.c.l.b16 %v1316
        %v1338 = vunpack.c.l.b16 %v1320
        %v1339 = vunpack.c.l.b16 %v1324
        %v1340 = vunpack.c.l.b16 %v1328
        %v1341 = vpack.c.b16 %v1334, %v1333
        %v1342 = vpack.c.b16 %v1336, %v1335
        %v1343 = vpack.c.b16 %v1338, %v1337
        %v1344 = vpack.c.b16 %v1340, %v1339
        %v1349 = vunpack.c.l.b16 %v1329
        %v1350 = vunpack.c.h.b16 %v1329
        %v1351 = vunpack.c.l.b16 %v1330
        %v1352 = vunpack.c.h.b16 %v1330
        %v1353 = vunpack.c.l.b16 %v1331
        %v1354 = vunpack.c.h.b16 %v1331
        %v1355 = vunpack.c.l.b16 %v1332
        %v1356 = vunpack.c.h.b16 %v1332
        %v1357 = vpack.c.b16 %v1351, %v1349
        %v1358 = vpack.c.b16 %v1352, %v1350
        %v1359 = vpack.c.b16 %v1355, %v1353
        %v1360 = vpack.c.b16 %v1356, %v1354
        %v1366 = vsel %vm447, %v1341, 0
        %v1369 = vsel %vm447, %v1342, 0
        %v1372 = vsel %vm447, %v1343, 0
        %v1375 = vsel %vm447, %v1344, 0
        %1377 = vmatprep.subr.bf16.mxu0 %v1358
        %1378 = vmatpush1.bf16.msra.mxu0 %v1357
        %1379 = vmatprep.subr.bf16.mxu0 %v1360
        %1380 = vmatpush1.bf16.msra.mxu0 %v1359
        %1381 = vmatprep.subr.bf16.mxu0 0
        %1382 = vmatpush1.bf16.msra.mxu0 0
        %1383 = vmatprep.subr.bf16.mxu0 0
        %1384 = vmatpush1.bf16.msra.mxu0 0
        %1385 = vmatprep.subr.bf16.mxu0 0
        %1386 = vmatpush1.bf16.msra.mxu0 0
        %1387 = vmatprep.subr.bf16.mxu0 0
        %1388 = vmatpush1.bf16.msra.mxu0 0
        %1389 = vmatprep.subr.bf16.mxu0 0
        %1390 = vmatpush1.bf16.msra.mxu0 0
        %1391 = vmatprep.subr.bf16.mxu0 0
        %1392 = vmatpush1.bf16.msra.mxu0 0
        %1393 = vmatprep.subr.bf16.mxu0 0
        %1394 = vmatpush1.bf16.msra.mxu0 0
        %1395 = vmatprep.subr.bf16.mxu0 0
        %1396 = vmatpush1.bf16.msra.mxu0 0
        %1397 = vmatprep.subr.bf16.mxu0 0
        %1398 = vmatpush1.bf16.msra.mxu0 0
        %1399 = vmatprep.subr.bf16.mxu0 0
        %1400 = vmatpush1.bf16.msra.mxu0 0
        %1401 = vmatprep.subr.bf16.mxu0 0
        %1402 = vmatpush1.bf16.msra.mxu0 0
        %1403 = vmatprep.subr.bf16.mxu0 0
        %1404 = vmatpush1.bf16.msra.mxu0 0
        %1405 = vmatprep.subr.bf16.mxu0 0
        %1406 = vmatpush1.bf16.msra.mxu0 0
        %1407 = vmatprep.subr.bf16.mxu0 0
        %1408 = vmatpush1.bf16.msra.mxu0 0
        %1409 = vmatprep.mubr.bf16.mxu0 0
        %1410 = vmatmul.mubr.bf16.gmra.mrb[0].mxu0 %v1366
        %v1411 = vpop.f32.mrb[0].mxu0
        %v1412 = vadd.f32 0.0, %v1411
        %v1413 = vpop.f32.mrb[0].mxu0
        %v1414 = vadd.f32 0.0, %v1413
        %v1415 = vpop.f32.mrb[0].mxu0
        %v1416 = vadd.f32 0.0, %v1415
        %v1417 = vpop.f32.mrb[0].mxu0
        %v1418 = vadd.f32 0.0, %v1417
        %1419 = vmatprep.mubr.bf16.mxu0 0
        %1420 = vmatmul.mubr.bf16.gmra.mrb[0].mxu0 %v1369
        %v1421 = vpop.f32.mrb[0].mxu0
        %v1422 = vadd.f32 0.0, %v1421
        %v1423 = vpop.f32.mrb[0].mxu0
        %v1424 = vadd.f32 0.0, %v1423
        %v1425 = vpop.f32.mrb[0].mxu0
        %v1426 = vadd.f32 0.0, %v1425
        %v1427 = vpop.f32.mrb[0].mxu0
        %v1428 = vadd.f32 0.0, %v1427
        %1429 = vmatprep.mubr.bf16.mxu0 0
        %1430 = vmatmul.mubr.bf16.gmra.mrb[0].mxu0 %v1372
        %v1431 = vpop.f32.mrb[0].mxu0
        %v1432 = vadd.f32 0.0, %v1431
        %v1433 = vpop.f32.mrb[0].mxu0
        %v1434 = vadd.f32 0.0, %v1433
        %v1435 = vpop.f32.mrb[0].mxu0
        %v1436 = vadd.f32 0.0, %v1435
        %v1437 = vpop.f32.mrb[0].mxu0
        %v1438 = vadd.f32 0.0, %v1437
        %1439 = vmatprep.mubr.bf16.mxu0 0
        %1440 = vmatmul.mubr.bf16.gmra.mrb[0].mxu0 %v1375
        %v1441 = vpop.f32.mrb[0].mxu0
        %v1442 = vadd.f32 0.0, %v1441
        %v1443 = vpop.f32.mrb[0].mxu0
        %v1444 = vadd.f32 0.0, %v1443
        %v1445 = vpop.f32.mrb[0].mxu0
        %v1446 = vadd.f32 0.0, %v1445
        %v1447 = vpop.f32.mrb[0].mxu0
        %v1448 = vadd.f32 0.0, %v1447
        %1449 = vdwg.mxu0
        %v1450 = vadd.f32 %v1257, %v1412
        %v1451 = vadd.f32 %v1258, %v1414
        %v1452 = vadd.f32 %v1259, %v1416
        %v1453 = vadd.f32 %v1260, %v1418
        %v1454 = vadd.f32 %v1261, %v1422
        %v1455 = vadd.f32 %v1262, %v1424
        %v1456 = vadd.f32 %v1263, %v1426
        %v1457 = vadd.f32 %v1264, %v1428
        %v1458 = vadd.f32 %v1265, %v1432
        %v1459 = vadd.f32 %v1266, %v1434
        %v1460 = vadd.f32 %v1267, %v1436
        %v1461 = vadd.f32 %v1268, %v1438
        %v1462 = vadd.f32 %v1269, %v1442
        %v1463 = vadd.f32 %v1270, %v1444
        %v1464 = vadd.f32 %v1271, %v1446
        %v1465 = vadd.f32 %v1272, %v1448
        %s1466 = scalar_lea.vmem %s272, 16
        %v1467 = vld [vmem:[%s1466] sm:$0xf]
        %v1468 = vld [vmem:[%s1466 + $0x8] sm:$0xf]
        %v1469 = vld [vmem:[%s1466 + $0x10] sm:$0xf]
        %v1470 = vld [vmem:[%s1466 + $0x18] sm:$0xf]
        %v1471 = vld [vmem:[%s1466 + $0x20] sm:$0xf]
        %v1472 = vld [vmem:[%s1466 + $0x28] sm:$0xf]
        %v1473 = vld [vmem:[%s1466 + $0x30] sm:$0xf]
        %v1474 = vld [vmem:[%s1466 + $0x38] sm:$0xf]
        %v1475 = vld [vmem:[%s230 + $0xc0] sm:$0xff]
        %v1476 = vld [vmem:[%s230 + $0xc8] sm:$0xff]
        %v1477 = vld [vmem:[%s230 + $0xd0] sm:$0xff]
        %v1478 = vld [vmem:[%s230 + $0xd8] sm:$0xff]
        %v1487 = vunpack.c.l.b16 %v1467
        %v1488 = vunpack.c.l.b16 %v1468
        %v1489 = vunpack.c.l.b16 %v1469
        %v1490 = vunpack.c.l.b16 %v1470
        %v1491 = vunpack.c.l.b16 %v1471
        %v1492 = vunpack.c.l.b16 %v1472
        %v1493 = vunpack.c.l.b16 %v1473
        %v1494 = vunpack.c.l.b16 %v1474
        %v1495 = vpack.c.b16 %v1488, %v1487
        %v1496 = vpack.c.b16 %v1490, %v1489
        %v1497 = vpack.c.b16 %v1492, %v1491
        %v1498 = vpack.c.b16 %v1494, %v1493
        %v1503 = vunpack.c.l.b16 %v1475
        %v1504 = vunpack.c.h.b16 %v1475
        %v1505 = vunpack.c.l.b16 %v1476
        %v1506 = vunpack.c.h.b16 %v1476
        %v1507 = vunpack.c.l.b16 %v1477
        %v1508 = vunpack.c.h.b16 %v1477
        %v1509 = vunpack.c.l.b16 %v1478
        %v1510 = vunpack.c.h.b16 %v1478
        %v1511 = vpack.c.b16 %v1505, %v1503
        %v1512 = vpack.c.b16 %v1506, %v1504
        %v1513 = vpack.c.b16 %v1509, %v1507
        %v1514 = vpack.c.b16 %v1510, %v1508
        %v1520 = vsel %vm447, %v1495, 0
        %v1523 = vsel %vm447, %v1496, 0
        %v1526 = vsel %vm447, %v1497, 0
        %v1529 = vsel %vm447, %v1498, 0
        %1531 = vmatprep.subr.bf16.mxu0 %v1512
        %1532 = vmatpush1.bf16.msra.mxu0 %v1511
        %1533 = vmatprep.subr.bf16.mxu0 %v1514
        %1534 = vmatpush1.bf16.msra.mxu0 %v1513
        %1535 = vmatprep.subr.bf16.mxu0 0
        %1536 = vmatpush1.bf16.msra.mxu0 0
        %1537 = vmatprep.subr.bf16.mxu0 0
        %1538 = vmatpush1.bf16.msra.mxu0 0
        %1539 = vmatprep.subr.bf16.mxu0 0
        %1540 = vmatpush1.bf16.msra.mxu0 0
        %1541 = vmatprep.subr.bf16.mxu0 0
        %1542 = vmatpush1.bf16.msra.mxu0 0
        %1543 = vmatprep.subr.bf16.mxu0 0
        %1544 = vmatpush1.bf16.msra.mxu0 0
        %1545 = vmatprep.subr.bf16.mxu0 0
        %1546 = vmatpush1.bf16.msra.mxu0 0
        %1547 = vmatprep.subr.bf16.mxu0 0
        %1548 = vmatpush1.bf16.msra.mxu0 0
        %1549 = vmatprep.subr.bf16.mxu0 0
        %1550 = vmatpush1.bf16.msra.mxu0 0
        %1551 = vmatprep.subr.bf16.mxu0 0
        %1552 = vmatpush1.bf16.msra.mxu0 0
        %1553 = vmatprep.subr.bf16.mxu0 0
        %1554 = vmatpush1.bf16.msra.mxu0 0
        %1555 = vmatprep.subr.bf16.mxu0 0
        %1556 = vmatpush1.bf16.msra.mxu0 0
        %1557 = vmatprep.subr.bf16.mxu0 0
        %1558 = vmatpush1.bf16.msra.mxu0 0
        %1559 = vmatprep.subr.bf16.mxu0 0
        %1560 = vmatpush1.bf16.msra.mxu0 0
        %1561 = vmatprep.subr.bf16.mxu0 0
        %1562 = vmatpush1.bf16.msra.mxu0 0
        %1563 = vmatprep.mubr.bf16.mxu0 0
        %1564 = vmatmul.mubr.bf16.gmra.mrb[0].mxu0 %v1520
        %v1565 = vpop.f32.mrb[0].mxu0
        %v1566 = vadd.f32 0.0, %v1565
        %v1567 = vpop.f32.mrb[0].mxu0
        %v1568 = vadd.f32 0.0, %v1567
        %v1569 = vpop.f32.mrb[0].mxu0
        %v1570 = vadd.f32 0.0, %v1569
        %v1571 = vpop.f32.mrb[0].mxu0
        %v1572 = vadd.f32 0.0, %v1571
        %1573 = vmatprep.mubr.bf16.mxu0 0
        %1574 = vmatmul.mubr.bf16.gmra.mrb[0].mxu0 %v1523
        %v1575 = vpop.f32.mrb[0].mxu0
        %v1576 = vadd.f32 0.0, %v1575
        %v1577 = vpop.f32.mrb[0].mxu0
        %v1578 = vadd.f32 0.0, %v1577
        %v1579 = vpop.f32.mrb[0].mxu0
        %v1580 = vadd.f32 0.0, %v1579
        %v1581 = vpop.f32.mrb[0].mxu0
        %v1582 = vadd.f32 0.0, %v1581
        %1583 = vmatprep.mubr.bf16.mxu0 0
        %1584 = vmatmul.mubr.bf16.gmra.mrb[0].mxu0 %v1526
        %v1585 = vpop.f32.mrb[0].mxu0
        %v1586 = vadd.f32 0.0, %v1585
        %v1587 = vpop.f32.mrb[0].mxu0
        %v1588 = vadd.f32 0.0, %v1587
        %v1589 = vpop.f32.mrb[0].mxu0
        %v1590 = vadd.f32 0.0, %v1589
        %v1591 = vpop.f32.mrb[0].mxu0
        %v1592 = vadd.f32 0.0, %v1591
        %1593 = vmatprep.mubr.bf16.mxu0 0
        %1594 = vmatmul.mubr.bf16.gmra.mrb[0].mxu0 %v1529
        %v1595 = vpop.f32.mrb[0].mxu0
        %v1596 = vadd.f32 0.0, %v1595
        %v1597 = vpop.f32.mrb[0].mxu0
        %v1598 = vadd.f32 0.0, %v1597
        %v1599 = vpop.f32.mrb[0].mxu0
        %v1600 = vadd.f32 0.0, %v1599
        %v1601 = vpop.f32.mrb[0].mxu0
        %v1602 = vadd.f32 0.0, %v1601
        %1603 = vdwg.mxu0
        %v1604 = vadd.f32 %v1450, %v1566
        %v1605 = vadd.f32 %v1451, %v1568
        %v1606 = vadd.f32 %v1452, %v1570
        %v1607 = vadd.f32 %v1453, %v1572
        %v1608 = vadd.f32 %v1454, %v1576
        %v1609 = vadd.f32 %v1455, %v1578
        %v1610 = vadd.f32 %v1456, %v1580
        %v1611 = vadd.f32 %v1457, %v1582
        %v1612 = vadd.f32 %v1458, %v1586
        %v1613 = vadd.f32 %v1459, %v1588
        %v1614 = vadd.f32 %v1460, %v1590
        %v1615 = vadd.f32 %v1461, %v1592
        %v1616 = vadd.f32 %v1462, %v1596
        %v1617 = vadd.f32 %v1463, %v1598
        %v1618 = vadd.f32 %v1464, %v1600
        %v1619 = vadd.f32 %v1465, %v1602
        %v1620 = vld [vmem:[%s1466] sm:$0xf]
        %v1621 = vld [vmem:[%s1466 + $0x4] sm:$0x1]
        %v1622 = vld [vmem:[%s1466 + $0x8] sm:$0xf]
        %v1623 = vld [vmem:[%s1466 + $0xc] sm:$0x1]
        %v1624 = vld [vmem:[%s1466 + $0x10] sm:$0xf]
        %v1625 = vld [vmem:[%s1466 + $0x14] sm:$0x1]
        %v1626 = vld [vmem:[%s1466 + $0x18] sm:$0xf]
        %v1627 = vld [vmem:[%s1466 + $0x1c] sm:$0x1]
        %v1628 = vld [vmem:[%s1466 + $0x20] sm:$0xf]
        %v1629 = vld [vmem:[%s1466 + $0x24] sm:$0x1]
        %v1630 = vld [vmem:[%s1466 + $0x28] sm:$0xf]
        %v1631 = vld [vmem:[%s1466 + $0x2c] sm:$0x1]
        %v1632 = vld [vmem:[%s1466 + $0x30] sm:$0xf]
        %v1633 = vld [vmem:[%s1466 + $0x34] sm:$0x1]
        %v1634 = vld [vmem:[%s1466 + $0x38] sm:$0xf]
        %v1635 = vld [vmem:[%s1466 + $0x3c] sm:$0x1]
        %v1637 = vshrl.u32 %v1620, 16
        %v1639 = vrot.slane %v1637, 4
        %v1640 = vshll.u32 %v1620, 16
        %v1642 = vrot.slane %v1640, 5
        %v1643 = vor.u32 %v1639, %v1642
        %v1644 = vrot.slane %v1643, 4
        %v1646 = vshll.u32 %v1621, 16
        %v1648 = vrot.slane %v1646, 5
        %v1649 = vsel %vm298, %v1644, %v1648
        %v1651 = vshrl.u32 %v1622, 16
        %v1653 = vrot.slane %v1651, 4
        %v1654 = vshll.u32 %v1622, 16
        %v1656 = vrot.slane %v1654, 5
        %v1657 = vor.u32 %v1653, %v1656
        %v1658 = vrot.slane %v1657, 4
        %v1660 = vshll.u32 %v1623, 16
        %v1662 = vrot.slane %v1660, 5
        %v1663 = vsel %vm298, %v1658, %v1662
        %v1665 = vshrl.u32 %v1624, 16
        %v1667 = vrot.slane %v1665, 4
        %v1668 = vshll.u32 %v1624, 16
        %v1670 = vrot.slane %v1668, 5
        %v1671 = vor.u32 %v1667, %v1670
        %v1672 = vrot.slane %v1671, 4
        %v1674 = vshll.u32 %v1625, 16
        %v1676 = vrot.slane %v1674, 5
        %v1677 = vsel %vm298, %v1672, %v1676
        %v1679 = vshrl.u32 %v1626, 16
        %v1681 = vrot.slane %v1679, 4
        %v1682 = vshll.u32 %v1626, 16
        %v1684 = vrot.slane %v1682, 5
        %v1685 = vor.u32 %v1681, %v1684
        %v1686 = vrot.slane %v1685, 4
        %v1688 = vshll.u32 %v1627, 16
        %v1690 = vrot.slane %v1688, 5
        %v1691 = vsel %vm298, %v1686, %v1690
        %v1693 = vshrl.u32 %v1628, 16
        %v1695 = vrot.slane %v1693, 4
        %v1696 = vshll.u32 %v1628, 16
        %v1698 = vrot.slane %v1696, 5
        %v1699 = vor.u32 %v1695, %v1698
        %v1700 = vrot.slane %v1699, 4
        %v1702 = vshll.u32 %v1629, 16
        %v1704 = vrot.slane %v1702, 5
        %v1705 = vsel %vm298, %v1700, %v1704
        %v1707 = vshrl.u32 %v1630, 16
        %v1709 = vrot.slane %v1707, 4
        %v1710 = vshll.u32 %v1630, 16
        %v1712 = vrot.slane %v1710, 5
        %v1713 = vor.u32 %v1709, %v1712
        %v1714 = vrot.slane %v1713, 4
        %v1716 = vshll.u32 %v1631, 16
        %v1718 = vrot.slane %v1716, 5
        %v1719 = vsel %vm298, %v1714, %v1718
        %v1721 = vshrl.u32 %v1632, 16
        %v1723 = vrot.slane %v1721, 4
        %v1724 = vshll.u32 %v1632, 16
        %v1726 = vrot.slane %v1724, 5
        %v1727 = vor.u32 %v1723, %v1726
        %v1728 = vrot.slane %v1727, 4
        %v1730 = vshll.u32 %v1633, 16
        %v1732 = vrot.slane %v1730, 5
        %v1733 = vsel %vm298, %v1728, %v1732
        %v1735 = vshrl.u32 %v1634, 16
        %v1737 = vrot.slane %v1735, 4
        %v1738 = vshll.u32 %v1634, 16
        %v1740 = vrot.slane %v1738, 5
        %v1741 = vor.u32 %v1737, %v1740
        %v1742 = vrot.slane %v1741, 4
        %v1744 = vshll.u32 %v1635, 16
        %v1746 = vrot.slane %v1744, 5
        %v1747 = vsel %vm298, %v1742, %v1746
        %v1748 = vld [vmem:[%s230 + $0xe0] sm:$0xff]
        %v1749 = vld [vmem:[%s230 + $0xe8] sm:$0xff]
        %v1750 = vld [vmem:[%s230 + $0xf0] sm:$0xff]
        %v1751 = vld [vmem:[%s230 + $0xf8] sm:$0xff]
        %v1752 = vunpack.c.l.b16 %v1649
        %v1753 = vunpack.c.l.b16 %v1663
        %v1754 = vunpack.c.l.b16 %v1677
        %v1755 = vunpack.c.l.b16 %v1691
        %v1756 = vunpack.c.l.b16 %v1705
        %v1757 = vunpack.c.l.b16 %v1719
        %v1758 = vunpack.c.l.b16 %v1733
        %v1759 = vunpack.c.l.b16 %v1747
        %v1760 = vpack.c.b16 %v1753, %v1752
        %v1761 = vpack.c.b16 %v1755, %v1754
        %v1762 = vpack.c.b16 %v1757, %v1756
        %v1763 = vpack.c.b16 %v1759, %v1758
        %v1768 = vunpack.c.l.b16 %v1748
        %v1769 = vunpack.c.h.b16 %v1748
        %v1770 = vunpack.c.l.b16 %v1749
        %v1771 = vunpack.c.h.b16 %v1749
        %v1772 = vunpack.c.l.b16 %v1750
        %v1773 = vunpack.c.h.b16 %v1750
        %v1774 = vunpack.c.l.b16 %v1751
        %v1775 = vunpack.c.h.b16 %v1751
        %v1776 = vpack.c.b16 %v1770, %v1768
        %v1777 = vpack.c.b16 %v1771, %v1769
        %v1778 = vpack.c.b16 %v1774, %v1772
        %v1779 = vpack.c.b16 %v1775, %v1773
        %v1785 = vsel %vm447, %v1760, 0
        %v1788 = vsel %vm447, %v1761, 0
        %v1791 = vsel %vm447, %v1762, 0
        %v1794 = vsel %vm447, %v1763, 0
        %1796 = vmatprep.subr.bf16.mxu0 %v1777
        %1797 = vmatpush1.bf16.msra.mxu0 %v1776
        %1798 = vmatprep.subr.bf16.mxu0 %v1779
        %1799 = vmatpush1.bf16.msra.mxu0 %v1778
        %1800 = vmatprep.subr.bf16.mxu0 0
        %1801 = vmatpush1.bf16.msra.mxu0 0
        %1802 = vmatprep.subr.bf16.mxu0 0
        %1803 = vmatpush1.bf16.msra.mxu0 0
        %1804 = vmatprep.subr.bf16.mxu0 0
        %1805 = vmatpush1.bf16.msra.mxu0 0
        %1806 = vmatprep.subr.bf16.mxu0 0
        %1807 = vmatpush1.bf16.msra.mxu0 0
        %1808 = vmatprep.subr.bf16.mxu0 0
        %1809 = vmatpush1.bf16.msra.mxu0 0
        %1810 = vmatprep.subr.bf16.mxu0 0
        %1811 = vmatpush1.bf16.msra.mxu0 0
        %1812 = vmatprep.subr.bf16.mxu0 0
        %1813 = vmatpush1.bf16.msra.mxu0 0
        %1814 = vmatprep.subr.bf16.mxu0 0
        %1815 = vmatpush1.bf16.msra.mxu0 0
        %1816 = vmatprep.subr.bf16.mxu0 0
        %1817 = vmatpush1.bf16.msra.mxu0 0
        %1818 = vmatprep.subr.bf16.mxu0 0
        %1819 = vmatpush1.bf16.msra.mxu0 0
        %1820 = vmatprep.subr.bf16.mxu0 0
        %1821 = vmatpush1.bf16.msra.mxu0 0
        %1822 = vmatprep.subr.bf16.mxu0 0
        %1823 = vmatpush1.bf16.msra.mxu0 0
        %1824 = vmatprep.subr.bf16.mxu0 0
        %1825 = vmatpush1.bf16.msra.mxu0 0
        %1826 = vmatprep.subr.bf16.mxu0 0
        %1827 = vmatpush1.bf16.msra.mxu0 0
        %1828 = vmatprep.mubr.bf16.mxu0 0
        %1829 = vmatmul.mubr.bf16.gmra.mrb[0].mxu0 %v1785
        %v1830 = vpop.f32.mrb[0].mxu0
        %v1831 = vadd.f32 0.0, %v1830
        %v1832 = vpop.f32.mrb[0].mxu0
        %v1833 = vadd.f32 0.0, %v1832
        %v1834 = vpop.f32.mrb[0].mxu0
        %v1835 = vadd.f32 0.0, %v1834
        %v1836 = vpop.f32.mrb[0].mxu0
        %v1837 = vadd.f32 0.0, %v1836
        %1838 = vmatprep.mubr.bf16.mxu0 0
        %1839 = vmatmul.mubr.bf16.gmra.mrb[0].mxu0 %v1788
        %v1840 = vpop.f32.mrb[0].mxu0
        %v1841 = vadd.f32 0.0, %v1840
        %v1842 = vpop.f32.mrb[0].mxu0
        %v1843 = vadd.f32 0.0, %v1842
        %v1844 = vpop.f32.mrb[0].mxu0
        %v1845 = vadd.f32 0.0, %v1844
        %v1846 = vpop.f32.mrb[0].mxu0
        %v1847 = vadd.f32 0.0, %v1846
        %1848 = vmatprep.mubr.bf16.mxu0 0
        %1849 = vmatmul.mubr.bf16.gmra.mrb[0].mxu0 %v1791
        %v1850 = vpop.f32.mrb[0].mxu0
        %v1851 = vadd.f32 0.0, %v1850
        %v1852 = vpop.f32.mrb[0].mxu0
        %v1853 = vadd.f32 0.0, %v1852
        %v1854 = vpop.f32.mrb[0].mxu0
        %v1855 = vadd.f32 0.0, %v1854
        %v1856 = vpop.f32.mrb[0].mxu0
        %v1857 = vadd.f32 0.0, %v1856
        %1858 = vmatprep.mubr.bf16.mxu0 0
        %1859 = vmatmul.mubr.bf16.gmra.mrb[0].mxu0 %v1794
        %v1860 = vpop.f32.mrb[0].mxu0
        %v1861 = vadd.f32 0.0, %v1860
        %v1862 = vpop.f32.mrb[0].mxu0
        %v1863 = vadd.f32 0.0, %v1862
        %v1864 = vpop.f32.mrb[0].mxu0
        %v1865 = vadd.f32 0.0, %v1864
        %v1866 = vpop.f32.mrb[0].mxu0
        %v1867 = vadd.f32 0.0, %v1866
        %1868 = vdwg.mxu0
        %v1869 = vadd.f32 %v1604, %v1831
        %v1870 = vadd.f32 %v1605, %v1833
        %v1871 = vadd.f32 %v1606, %v1835
        %v1872 = vadd.f32 %v1607, %v1837
        %v1873 = vadd.f32 %v1608, %v1841
        %v1874 = vadd.f32 %v1609, %v1843
        %v1875 = vadd.f32 %v1610, %v1845
        %v1876 = vadd.f32 %v1611, %v1847
        %v1877 = vadd.f32 %v1612, %v1851
        %v1878 = vadd.f32 %v1613, %v1853
        %v1879 = vadd.f32 %v1614, %v1855
        %v1880 = vadd.f32 %v1615, %v1857
        %v1881 = vadd.f32 %v1616, %v1861
        %v1882 = vadd.f32 %v1617, %v1863
        %v1883 = vadd.f32 %v1618, %v1865
        %v1884 = vadd.f32 %v1619, %v1867
        %v1885 = vld [vmem:[%s1466] sm:$0xe]
        %v1886 = vld [vmem:[%s1466 + $0x8] sm:$0xe]
        %v1887 = vld [vmem:[%s1466 + $0x10] sm:$0xe]
        %v1888 = vld [vmem:[%s1466 + $0x18] sm:$0xe]
        %v1889 = vld [vmem:[%s1466 + $0x20] sm:$0xe]
        %v1890 = vld [vmem:[%s1466 + $0x28] sm:$0xe]
        %v1891 = vld [vmem:[%s1466 + $0x30] sm:$0xe]
        %v1892 = vld [vmem:[%s1466 + $0x38] sm:$0xe]
        %v1909 = vrot.slane %v1885, 5
        %v1910 = vrot.slane %v1909, 4
        %v1911 = vrot.slane %v1621, 5
        %v1912 = vsel %vm684, %v1910, %v1911
        %v1913 = vrot.slane %v1886, 5
        %v1914 = vrot.slane %v1913, 4
        %v1915 = vrot.slane %v1623, 5
        %v1916 = vsel %vm684, %v1914, %v1915
        %v1917 = vrot.slane %v1887, 5
        %v1918 = vrot.slane %v1917, 4
        %v1919 = vrot.slane %v1625, 5
        %v1920 = vsel %vm684, %v1918, %v1919
        %v1921 = vrot.slane %v1888, 5
        %v1922 = vrot.slane %v1921, 4
        %v1923 = vrot.slane %v1627, 5
        %v1924 = vsel %vm684, %v1922, %v1923
        %v1925 = vrot.slane %v1889, 5
        %v1926 = vrot.slane %v1925, 4
        %v1927 = vrot.slane %v1629, 5
        %v1928 = vsel %vm684, %v1926, %v1927
        %v1929 = vrot.slane %v1890, 5
        %v1930 = vrot.slane %v1929, 4
        %v1931 = vrot.slane %v1631, 5
        %v1932 = vsel %vm684, %v1930, %v1931
        %v1933 = vrot.slane %v1891, 5
        %v1934 = vrot.slane %v1933, 4
        %v1935 = vrot.slane %v1633, 5
        %v1936 = vsel %vm684, %v1934, %v1935
        %v1937 = vrot.slane %v1892, 5
        %v1938 = vrot.slane %v1937, 4
        %v1939 = vrot.slane %v1635, 5
        %v1940 = vsel %vm684, %v1938, %v1939
        %v1941 = vld [vmem:[%s230 + $0x100] sm:$0xff]
        %v1942 = vld [vmem:[%s230 + $0x108] sm:$0xff]
        %v1943 = vld [vmem:[%s230 + $0x110] sm:$0xff]
        %v1944 = vld [vmem:[%s230 + $0x118] sm:$0xff]
        %v1945 = vunpack.c.l.b16 %v1912
        %v1946 = vunpack.c.l.b16 %v1916
        %v1947 = vunpack.c.l.b16 %v1920
        %v1948 = vunpack.c.l.b16 %v1924
        %v1949 = vunpack.c.l.b16 %v1928
        %v1950 = vunpack.c.l.b16 %v1932
        %v1951 = vunpack.c.l.b16 %v1936
        %v1952 = vunpack.c.l.b16 %v1940
        %v1953 = vpack.c.b16 %v1946, %v1945
        %v1954 = vpack.c.b16 %v1948, %v1947
        %v1955 = vpack.c.b16 %v1950, %v1949
        %v1956 = vpack.c.b16 %v1952, %v1951
        %v1961 = vunpack.c.l.b16 %v1941
        %v1962 = vunpack.c.h.b16 %v1941
        %v1963 = vunpack.c.l.b16 %v1942
        %v1964 = vunpack.c.h.b16 %v1942
        %v1965 = vunpack.c.l.b16 %v1943
        %v1966 = vunpack.c.h.b16 %v1943
        %v1967 = vunpack.c.l.b16 %v1944
        %v1968 = vunpack.c.h.b16 %v1944
        %v1969 = vpack.c.b16 %v1963, %v1961
        %v1970 = vpack.c.b16 %v1964, %v1962
        %v1971 = vpack.c.b16 %v1967, %v1965
        %v1972 = vpack.c.b16 %v1968, %v1966
        %v1978 = vsel %vm447, %v1953, 0
        %v1981 = vsel %vm447, %v1954, 0
        %v1984 = vsel %vm447, %v1955, 0
        %v1987 = vsel %vm447, %v1956, 0
        %1989 = vmatprep.subr.bf16.mxu0 %v1970
        %1990 = vmatpush1.bf16.msra.mxu0 %v1969
        %1991 = vmatprep.subr.bf16.mxu0 %v1972
        %1992 = vmatpush1.bf16.msra.mxu0 %v1971
        %1993 = vmatprep.subr.bf16.mxu0 0
        %1994 = vmatpush1.bf16.msra.mxu0 0
        %1995 = vmatprep.subr.bf16.mxu0 0
        %1996 = vmatpush1.bf16.msra.mxu0 0
        %1997 = vmatprep.subr.bf16.mxu0 0
        %1998 = vmatpush1.bf16.msra.mxu0 0
        %1999 = vmatprep.subr.bf16.mxu0 0
        %2000 = vmatpush1.bf16.msra.mxu0 0
        %2001 = vmatprep.subr.bf16.mxu0 0
        %2002 = vmatpush1.bf16.msra.mxu0 0
        %2003 = vmatprep.subr.bf16.mxu0 0
        %2004 = vmatpush1.bf16.msra.mxu0 0
        %2005 = vmatprep.subr.bf16.mxu0 0
        %2006 = vmatpush1.bf16.msra.mxu0 0
        %2007 = vmatprep.subr.bf16.mxu0 0
        %2008 = vmatpush1.bf16.msra.mxu0 0
        %2009 = vmatprep.subr.bf16.mxu0 0
        %2010 = vmatpush1.bf16.msra.mxu0 0
        %2011 = vmatprep.subr.bf16.mxu0 0
        %2012 = vmatpush1.bf16.msra.mxu0 0
        %2013 = vmatprep.subr.bf16.mxu0 0
        %2014 = vmatpush1.bf16.msra.mxu0 0
        %2015 = vmatprep.subr.bf16.mxu0 0
        %2016 = vmatpush1.bf16.msra.mxu0 0
        %2017 = vmatprep.subr.bf16.mxu0 0
        %2018 = vmatpush1.bf16.msra.mxu0 0
        %2019 = vmatprep.subr.bf16.mxu0 0
        %2020 = vmatpush1.bf16.msra.mxu0 0
        %2021 = vmatprep.mubr.bf16.mxu0 0
        %2022 = vmatmul.mubr.bf16.gmra.mrb[0].mxu0 %v1978
        %v2023 = vpop.f32.mrb[0].mxu0
        %v2024 = vadd.f32 0.0, %v2023
        %v2025 = vpop.f32.mrb[0].mxu0
        %v2026 = vadd.f32 0.0, %v2025
        %v2027 = vpop.f32.mrb[0].mxu0
        %v2028 = vadd.f32 0.0, %v2027
        %v2029 = vpop.f32.mrb[0].mxu0
        %v2030 = vadd.f32 0.0, %v2029
        %2031 = vmatprep.mubr.bf16.mxu0 0
        %2032 = vmatmul.mubr.bf16.gmra.mrb[0].mxu0 %v1981
        %v2033 = vpop.f32.mrb[0].mxu0
        %v2034 = vadd.f32 0.0, %v2033
        %v2035 = vpop.f32.mrb[0].mxu0
        %v2036 = vadd.f32 0.0, %v2035
        %v2037 = vpop.f32.mrb[0].mxu0
        %v2038 = vadd.f32 0.0, %v2037
        %v2039 = vpop.f32.mrb[0].mxu0
        %v2040 = vadd.f32 0.0, %v2039
        %2041 = vmatprep.mubr.bf16.mxu0 0
        %2042 = vmatmul.mubr.bf16.gmra.mrb[0].mxu0 %v1984
        %v2043 = vpop.f32.mrb[0].mxu0
        %v2044 = vadd.f32 0.0, %v2043
        %v2045 = vpop.f32.mrb[0].mxu0
        %v2046 = vadd.f32 0.0, %v2045
        %v2047 = vpop.f32.mrb[0].mxu0
        %v2048 = vadd.f32 0.0, %v2047
        %v2049 = vpop.f32.mrb[0].mxu0
        %v2050 = vadd.f32 0.0, %v2049
        %2051 = vmatprep.mubr.bf16.mxu0 0
        %2052 = vmatmul.mubr.bf16.gmra.mrb[0].mxu0 %v1987
        %v2053 = vpop.f32.mrb[0].mxu0
        %v2054 = vadd.f32 0.0, %v2053
        %v2055 = vpop.f32.mrb[0].mxu0
        %v2056 = vadd.f32 0.0, %v2055
        %v2057 = vpop.f32.mrb[0].mxu0
        %v2058 = vadd.f32 0.0, %v2057
        %v2059 = vpop.f32.mrb[0].mxu0
        %v2060 = vadd.f32 0.0, %v2059
        %2061 = vdwg.mxu0
        %v2062 = vadd.f32 %v1869, %v2024
        %v2063 = vadd.f32 %v1870, %v2026
        %v2064 = vadd.f32 %v1871, %v2028
        %v2065 = vadd.f32 %v1872, %v2030
        %v2066 = vadd.f32 %v1873, %v2034
        %v2067 = vadd.f32 %v1874, %v2036
        %v2068 = vadd.f32 %v1875, %v2038
        %v2069 = vadd.f32 %v1876, %v2040
        %v2070 = vadd.f32 %v1877, %v2044
        %v2071 = vadd.f32 %v1878, %v2046
        %v2072 = vadd.f32 %v1879, %v2048
        %v2073 = vadd.f32 %v1880, %v2050
        %v2074 = vadd.f32 %v1881, %v2054
        %v2075 = vadd.f32 %v1882, %v2056
        %v2076 = vadd.f32 %v1883, %v2058
        %v2077 = vadd.f32 %v1884, %v2060
        %v2078 = vld [vmem:[%s2] sm:$0x3]
        %v2080 = vlaneseq
        %v2081 = vshrl.u32 %v2080, 7
        %v2082 = vsub.s32 0, %v2081
        %v2083 = vrot.slane %v2078, %v2082
        %v2084 = vlaneseq
        %v2085 = vshrl.u32 %v2084, 7
        %v2086 = vsub.s32 1, %v2085
        %v2087 = vrot.slane %v2078, %v2086
        %v2090 = vmul.f32 %v2062, %v2083
        %v2091 = vmul.f32 %v2063, %v2087
        %v2092 = vmul.f32 %v2064, %v2083
        %v2093 = vmul.f32 %v2065, %v2087
        %v2094 = vmul.f32 %v2066, %v2083
        %v2095 = vmul.f32 %v2067, %v2087
        %v2096 = vmul.f32 %v2068, %v2083
        %v2097 = vmul.f32 %v2069, %v2087
        %v2098 = vmul.f32 %v2070, %v2083
        %v2099 = vmul.f32 %v2071, %v2087
        %v2100 = vmul.f32 %v2072, %v2083
        %v2101 = vmul.f32 %v2073, %v2087
        %v2102 = vmul.f32 %v2074, %v2083
        %v2103 = vmul.f32 %v2075, %v2087
        %v2104 = vmul.f32 %v2076, %v2083
        %v2105 = vmul.f32 %v2077, %v2087
        %v2106 = vld [vmem:[%s3] sm:$0x3]
        %v2108 = vlaneseq
        %v2109 = vshrl.u32 %v2108, 7
        %v2110 = vsub.s32 0, %v2109
        %v2111 = vrot.slane %v2106, %v2110
        %v2112 = vlaneseq
        %v2113 = vshrl.u32 %v2112, 7
        %v2114 = vsub.s32 1, %v2113
        %v2115 = vrot.slane %v2106, %v2114
        %v2118 = vadd.f32 %v2090, %v2111
        %v2119 = vadd.f32 %v2091, %v2115
        %v2120 = vadd.f32 %v2092, %v2111
        %v2121 = vadd.f32 %v2093, %v2115
        %v2122 = vadd.f32 %v2094, %v2111
        %v2123 = vadd.f32 %v2095, %v2115
        %v2124 = vadd.f32 %v2096, %v2111
        %v2125 = vadd.f32 %v2097, %v2115
        %v2126 = vadd.f32 %v2098, %v2111
        %v2127 = vadd.f32 %v2099, %v2115
        %v2128 = vadd.f32 %v2100, %v2111
        %v2129 = vadd.f32 %v2101, %v2115
        %v2130 = vadd.f32 %v2102, %v2111
        %v2131 = vadd.f32 %v2103, %v2115
        %v2132 = vadd.f32 %v2104, %v2111
        %v2133 = vadd.f32 %v2105, %v2115
        %v2134 = vmax.f32 %v2118, 0.0
        %v2135 = vmax.f32 %v2119, 0.0
        %v2136 = vmax.f32 %v2120, 0.0
        %v2137 = vmax.f32 %v2121, 0.0
        %v2138 = vmax.f32 %v2122, 0.0
        %v2139 = vmax.f32 %v2123, 0.0
        %v2140 = vmax.f32 %v2124, 0.0
        %v2141 = vmax.f32 %v2125, 0.0
        %v2142 = vmax.f32 %v2126, 0.0
        %v2143 = vmax.f32 %v2127, 0.0
        %v2144 = vmax.f32 %v2128, 0.0
        %v2145 = vmax.f32 %v2129, 0.0
        %v2146 = vmax.f32 %v2130, 0.0
        %v2147 = vmax.f32 %v2131, 0.0
        %v2148 = vmax.f32 %v2132, 0.0
        %v2149 = vmax.f32 %v2133, 0.0
        %v2166 = vcombine.low %v2134, %v2135
        %v2167 = vcombine.high %v2134, %v2135
        %v2168 = vcombine.low %v2136, %v2137
        %v2169 = vcombine.high %v2136, %v2137
        %v2170 = vcombine.low %v2138, %v2139
        %v2171 = vcombine.high %v2138, %v2139
        %v2172 = vcombine.low %v2140, %v2141
        %v2173 = vcombine.high %v2140, %v2141
        %v2174 = vcombine.low %v2142, %v2143
        %v2175 = vcombine.high %v2142, %v2143
        %v2176 = vcombine.low %v2144, %v2145
        %v2177 = vcombine.high %v2144, %v2145
        %v2178 = vcombine.low %v2146, %v2147
        %v2179 = vcombine.high %v2146, %v2147
        %v2180 = vcombine.low %v2148, %v2149
        %v2181 = vcombine.high %v2148, %v2149
        %v2199 = vunpack.c.l.s4 1935823168
        %v2200 = vunpack.c.0.s8 %v2199
        %v2201 = vlaneseq
        %v2202 = vshrl.u32 %v2201, 7
        %v2203 = vsub.s32 %v2200, %v2202
        %v2204 = vrot.slane %v2166, %v2203
        %v2206 = vunpack.c.l.s4 1935823168
        %v2207 = vunpack.c.0.s8 %v2206
        %v2208 = vlaneseq
        %v2209 = vshrl.u32 %v2208, 7
        %v2210 = vsub.s32 %v2207, %v2209
        %v2211 = vrot.slane %v2167, %v2210
        %v2213 = vunpack.c.l.s4 1935823168
        %v2214 = vunpack.c.0.s8 %v2213
        %v2215 = vlaneseq
        %v2216 = vshrl.u32 %v2215, 7
        %v2217 = vsub.s32 %v2214, %v2216
        %v2218 = vrot.slane %v2168, %v2217
        %v2220 = vunpack.c.l.s4 1935823168
        %v2221 = vunpack.c.0.s8 %v2220
        %v2222 = vlaneseq
        %v2223 = vshrl.u32 %v2222, 7
        %v2224 = vsub.s32 %v2221, %v2223
        %v2225 = vrot.slane %v2169, %v2224
        %v2227 = vunpack.c.l.s4 1935823168
        %v2228 = vunpack.c.0.s8 %v2227
        %v2229 = vlaneseq
        %v2230 = vshrl.u32 %v2229, 7
        %v2231 = vsub.s32 %v2228, %v2230
        %v2232 = vrot.slane %v2170, %v2231
        %v2234 = vunpack.c.l.s4 1935823168
        %v2235 = vunpack.c.0.s8 %v2234
        %v2236 = vlaneseq
        %v2237 = vshrl.u32 %v2236, 7
        %v2238 = vsub.s32 %v2235, %v2237
        %v2239 = vrot.slane %v2171, %v2238
        %v2241 = vunpack.c.l.s4 1935823168
        %v2242 = vunpack.c.0.s8 %v2241
        %v2243 = vlaneseq
        %v2244 = vshrl.u32 %v2243, 7
        %v2245 = vsub.s32 %v2242, %v2244
        %v2246 = vrot.slane %v2172, %v2245
        %v2248 = vunpack.c.l.s4 1935823168
        %v2249 = vunpack.c.0.s8 %v2248
        %v2250 = vlaneseq
        %v2251 = vshrl.u32 %v2250, 7
        %v2252 = vsub.s32 %v2249, %v2251
        %v2253 = vrot.slane %v2173, %v2252
        %v2255 = vunpack.c.l.s4 1935823168
        %v2256 = vunpack.c.0.s8 %v2255
        %v2257 = vlaneseq
        %v2258 = vshrl.u32 %v2257, 7
        %v2259 = vsub.s32 %v2256, %v2258
        %v2260 = vrot.slane %v2174, %v2259
        %v2262 = vunpack.c.l.s4 1935823168
        %v2263 = vunpack.c.0.s8 %v2262
        %v2264 = vlaneseq
        %v2265 = vshrl.u32 %v2264, 7
        %v2266 = vsub.s32 %v2263, %v2265
        %v2267 = vrot.slane %v2175, %v2266
        %v2269 = vunpack.c.l.s4 1935823168
        %v2270 = vunpack.c.0.s8 %v2269
        %v2271 = vlaneseq
        %v2272 = vshrl.u32 %v2271, 7
        %v2273 = vsub.s32 %v2270, %v2272
        %v2274 = vrot.slane %v2176, %v2273
        %v2276 = vunpack.c.l.s4 1935823168
        %v2277 = vunpack.c.0.s8 %v2276
        %v2278 = vlaneseq
        %v2279 = vshrl.u32 %v2278, 7
        %v2280 = vsub.s32 %v2277, %v2279
        %v2281 = vrot.slane %v2177, %v2280
        %v2283 = vunpack.c.l.s4 1935823168
        %v2284 = vunpack.c.0.s8 %v2283
        %v2285 = vlaneseq
        %v2286 = vshrl.u32 %v2285, 7
        %v2287 = vsub.s32 %v2284, %v2286
        %v2288 = vrot.slane %v2178, %v2287
        %v2290 = vunpack.c.l.s4 1935823168
        %v2291 = vunpack.c.0.s8 %v2290
        %v2292 = vlaneseq
        %v2293 = vshrl.u32 %v2292, 7
        %v2294 = vsub.s32 %v2291, %v2293
        %v2295 = vrot.slane %v2179, %v2294
        %v2297 = vunpack.c.l.s4 1935823168
        %v2298 = vunpack.c.0.s8 %v2297
        %v2299 = vlaneseq
        %v2300 = vshrl.u32 %v2299, 7
        %v2301 = vsub.s32 %v2298, %v2300
        %v2302 = vrot.slane %v2180, %v2301
        %v2304 = vunpack.c.l.s4 1935823168
        %v2305 = vunpack.c.0.s8 %v2304
        %v2306 = vlaneseq
        %v2307 = vshrl.u32 %v2306, 7
        %v2308 = vsub.s32 %v2305, %v2307
        %v2309 = vrot.slane %v2181, %v2308
        %2310 = vst [vmem:[%s263] sm:$0xff] %v2204
        %2311 = vst [vmem:[%s263 + $0x8] sm:$0xff] %v2211
        %2312 = vst [vmem:[%s263 + $0x10] sm:$0xff] %v2218
        %2313 = vst [vmem:[%s263 + $0x18] sm:$0xff] %v2225
        %2314 = vst [vmem:[%s263 + $0x20] sm:$0xff] %v2232
        %2315 = vst [vmem:[%s263 + $0x28] sm:$0xff] %v2239
        %2316 = vst [vmem:[%s263 + $0x30] sm:$0xff] %v2246
        %2317 = vst [vmem:[%s263 + $0x38] sm:$0xff] %v2253
        %2318 = vst [vmem:[%s263 + $0x40] sm:$0xff] %v2260
        %2319 = vst [vmem:[%s263 + $0x48] sm:$0xff] %v2267
        %2320 = vst [vmem:[%s263 + $0x50] sm:$0xff] %v2274
        %2321 = vst [vmem:[%s263 + $0x58] sm:$0xff] %v2281
        %2322 = vst [vmem:[%s263 + $0x60] sm:$0xff] %v2288
        %2323 = vst [vmem:[%s263 + $0x68] sm:$0xff] %v2295
        %2324 = vst [vmem:[%s263 + $0x70] sm:$0xff] %v2302
        %2325 = vst [vmem:[%s263 + $0x78] sm:$0xff] %v2309
        %s2326 = sand.u32 %s148, 1
        %s2327 = scalar_lea.sflag [#allocation4], %s2326
        %s2328 = sand.u32 %s148, 1
        %s2329 = smul.addr %s2328, 128
        %s2330 = scalar_lea.vmem [#allocation5], %s2329
        // Predicated region
        $region41: #{tpu_custom_call.1} parent=35 // pred_check
          %p2331 = pneg %p158
        $region42: #{tpu_custom_call.1} parent=35 // pred_check_branch
          %2333 = sbr.rel (%p2331) target = $region44
        $region43: #{tpu_custom_call.1} parent=35 // pred_region
          #allocation7 [shape = 'u32[6]{0}', space=smem, size = 0x18, scoped, tag = 'DMA stride descriptor']
          %s2334 = sadd.s32 %s26, %s27
          %s2335 = smul.u32 8, %s2334
          %s2337 = ssub.s32 2048, 2048
          %2338 = vsyncadd %s2327, %s2337
          %s2339 = smul.addr %s28, 2
          %s2340 = smul.addr %s2335, 4
          %s2341 = sadd.s32 %s2339, %s2340
          %s2342 = smul.addr %s2341, 128
          %s2343 = scalar_lea.hbm %s4, %s2342
          %s2345 = sshll.u32 1, 14
          %s2346 = sxor.u32 4294967295, %s2345
          %s2349 = sshll.u32 7, 18
          %s2350 = sxor.u32 4294967295, %s2349
          %s2351 = sand.u32 0, %s2350
          %s2353 = sor.u32 %s2351, 0
          %s2355 = sshll.u32 3, 24
          %s2356 = sxor.u32 4294967295, %s2355
          %s2357 = sand.u32 %s2353, %s2356
          %s2359 = sor.u32 %s2357, 0
          %s2360 = sshll.u32 %s2330, 4
          %s2361 = int_to_ptr.vmem [resolvable:$true] %s2360
          %2367 = sst [smem:[#allocation7]] 256
          %s2368 = scalar_lea.smem [#allocation7], 1
          %2369 = sst [smem:[%s2368]] 512
          %s2370 = scalar_lea.smem [#allocation7], 2
          %2371 = sst [smem:[%s2370]] 2
          %s2372 = scalar_lea.smem [#allocation7], 3
          %2373 = sst [smem:[%s2372]] 128
          %s2374 = scalar_lea.smem [#allocation7], 4
          %2375 = sst [smem:[%s2374]] 128
          %s2376 = scalar_lea.smem [#allocation7], 5
          %2377 = sst [smem:[%s2376]] 8
          %2379 = dma.general %s2361, 2048, %s2343, %s2327, [#allocation6], [#allocation7], %s2359, 0
        $region44: #{tpu_custom_call.1} parent=35 // pred_fallthru
          _
      $region36: #{tpu_custom_call.1} parent=5 // pred_fallthru
        _
      %p2380 = scmp.le.s32.totalorder 2, %s16
      // Predicated region
      $region45: #{tpu_custom_call.1} parent=5 // pred_check
        %p2381 = pneg %p2380
      $region46: #{tpu_custom_call.1} parent=5 // pred_check_branch
        %2383 = sbr.rel (%p2381) target = $region48
      $region47: #{tpu_custom_call.1} parent=5 // pred_region
        %s2384 = ssub.s32 %s16, 2
        // Predicated region
        $region49: #{tpu_custom_call.1} parent=47 // pred_check
          %p2385 = pneg %p164
        $region50: #{tpu_custom_call.1} parent=47 // pred_check_branch
          %2387 = sbr.rel (%p2385) target = $region52
        $region51: #{tpu_custom_call.1} parent=47 // pred_region
          %s2388 = sand.u32 %s149, 1
          %s2389 = scalar_lea.sflag [#allocation4], %s2388
          %s2390 = sand.u32 %s149, 1
          %s2391 = smul.addr %s2390, 128
          %s2392 = scalar_lea.vmem [#allocation5], %s2391
          %2393 = dma.done %s2389, 2048
        $region52: #{tpu_custom_call.1} parent=47 // pred_fallthru
          _
      $region48: #{tpu_custom_call.1} parent=5 // pred_fallthru
        _
    $region6: #{tpu_custom_call.1} parent=1 // loop_footer
      %s20 = sadd.s32 1, %s16
    $region7: #{tpu_custom_call.1} parent=1 // loop_footer_branch
      %15 = sbr.rel target = $region3
    $region8: #{tpu_custom_call.1} parent=1 // loop_exit
      _
    %2394 = vsyncpa [#allocation3], 1
    %s2395 = scalar_lea.sflag [#allocation3], 1
    %2396 = vsyncpa %s2395, 1
    %2397 = vsyncpa [#allocation4], 1
    %s2398 = scalar_lea.sflag [#allocation4], 1
    %2399 = vsyncpa %s2398, 1

</llo_original>
